<compile_context>
chip_gen: v7x
topology: tpu7x:2x2x1
jax: 0.10.0
libtpu: 0.0.40
codegen_flags: <defaults>
</compile_context>

<pallas_src>
import functools
import math

import jax
import jax.numpy as jnp
from jax.experimental import pallas as pl
from jax.experimental.pallas import tpu as pltpu

# ---------------- model hyper-parameters (small, consistent with the module) ----------------
HIDDEN = 32            # opt.hiddenSize
NUM_HEADS = 2          # opt.global_att_head_nums
NUM_ATT_BLOCKS = 2     # opt.global_att_block_nums
STEP_GLOBAL = 1        # opt.step_global
FUSE_A = True          # opt.fuse_A
N_NODE = 50            # vocabulary size (n_node)
N_GLOBAL = 16          # number of unique global-graph nodes in this batch
BATCH = 2              # sessions
SEQ_LEN = 8            # session length (len_max)


# ---------------------------------- Pallas kernel ----------------------------------
def dgnn_kernel(ids_ref, idx_ref, emb_ref, a_ref,
                wh1_ref, wh2_ref, g0_ref, g1_ref,
                m_ref, p_ref, bffn_ref,
                wf0_ref, wf1_ref, bfuse_ref,
                out_ref,
                *, num_heads, num_blocks, step, fuse_a):
    """Fused DGNN forward.

    ids_ref   : [N, 1]  int32  global node ids (embedding rows to gather)
    idx_ref   : [B*S,1] int32  per-session node indices into the N global nodes
    emb_ref   : [V, H]  embedding table
    a_ref     : [N, N]  global adjacency
    wh1/wh2   : [H, H]  w_h chunks 1,2 (pre-transposed)
    g0/g1     : [H, H]  folded w_h chunk0 @ w_hf chunks (pre-transposed+folded)
    m_ref     : [blocks, heads, H, H]  folded Wq_h @ Wk_hᵀ
    p_ref     : [blocks, heads, H, H]  folded Wv_h @ Wffn rows
    bffn_ref  : [blocks, 1, H]
    wf0/wf1   : [H, H]  fuse-linear halves (pre-transposed)
    bfuse_ref : [1, H]
    out_ref   : [B*S, H]
    """
    f32 = jnp.float32
    dot = lambda a, b: jnp.dot(a, b, preferred_element_type=f32)
    # a @ bᵀ without materialising a transpose (contract last dim of both operands)
    dot_nt = lambda a, b: jax.lax.dot_general(
        a, b, dimension_numbers=(((1,), (1,)), ((), ())),
        preferred_element_type=f32)

    n = a_ref.shape[0]
    n_out = out_ref.shape[0]
    n_vocab = emb_ref.shape[0]

    # ---------------- fused embedding gather (exact one-hot matmul) ----------------
    ids = ids_ref[...]                                                 # [N, 1] int32
    onehot_in = (jax.lax.broadcasted_iota(jnp.int32, (n, n_vocab), 1) == ids).astype(f32)
    x0 = dot(onehot_in, emb_ref[...])                                  # [N, H]

    # ---------------- Global_GNN ----------------
    a_fused = a_ref[...]
    if fuse_a:
        corr = dot_nt(x0, x0)                                          # x0 @ x0ᵀ  [N, N]
        inv_norm = jax.lax.rsqrt(jnp.sum(corr * corr, axis=1, keepdims=True) + 1e-12)
        a_fused = a_fused + corr * inv_norm

    gnn = x0
    for _ in range(step):                                              # static unroll
        ax = dot(a_fused, gnn)                                         # [N, H]
        hf0 = dot(ax, g0_ref[...])                                     # == (A @ h @ Wh0ᵀ) @ Whf0ᵀ
        hf1 = dot(ax, g1_ref[...])
        hw1 = dot(gnn, wh1_ref[...])
        hw2 = dot(gnn, wh2_ref[...])
        gate = jnp.maximum(hf0 + hw1, 0.0)
        gnn = hw2 + gate * hf1                                         # [N, H]

    # ---------------- Global_ATT blocks (dropout == identity in eval) ----------------
    att_x = x0
    for b in range(num_blocks):
        ffn_in = jnp.zeros_like(att_x)                                 # [N, H]
        for hh in range(num_heads):
            t1 = dot(att_x, m_ref[b, hh])                              # x @ (Wq_h Wk_hᵀ)   [N, H]
            s = jnp.tanh(dot_nt(t1, att_x))                            # per-head scores    [N, N]
            u = dot(att_x, p_ref[b, hh])                               # x @ (Wv_h Wffn_h)  [N, H]
            ffn_in = ffn_in + dot(s, u)                                # head out folded into ffn
        att_x = att_x + jnp.maximum(ffn_in + bffn_ref[b], 0.0)

    # ---------------- global_fuse_linear (two transpose-free dots, no concat) ----------------
    fused = dot(gnn, wf0_ref[...]) + dot(att_x, wf1_ref[...]) + bfuse_ref[...]

    # ---------------- fused per-session gather (exact one-hot matmul) ----------------
    idx = idx_ref[...]                                                 # [B*S, 1] int32
    onehot_out = (jax.lax.broadcasted_iota(jnp.int32, (n_out, n), 1) == idx).astype(f32)
    out_ref[...] = dot(onehot_out, fused)                              # [B*S, H]


def _full_spec(shape):
    # whole-array block resident in VMEM (block_shape == full array dims)
    return pl.BlockSpec(shape, lambda i: (0,) * len(shape))


# ---------------------------------- host-side weight folding ----------------------------------
def fold_params(params):
    """One-time weight preprocessing (transpose + folding). In real use, cache the result."""
    hp = jax.lax.Precision.HIGHEST
    mm = lambda a, b: jnp.matmul(a, b, precision=hp)
    H = HIDDEN
    d = H // NUM_HEADS

    w_h, w_hf = params["w_h"], params["w_hf"]                 # [3H,H], [2H,H]
    wh0_t = w_h[:H].T
    wh1_t = w_h[H:2 * H].T
    wh2_t = w_h[2 * H:].T
    whf0_t = w_hf[:H].T
    whf1_t = w_hf[H:].T
    g0 = mm(wh0_t, whf0_t)                                    # (Wh0ᵀ)(Whf0ᵀ)  [H,H]
    g1 = mm(wh0_t, whf1_t)

    m_blocks, p_blocks = [], []
    for b in range(NUM_ATT_BLOCKS):
        wq_t = params["wq"][b].T                              # [H,H] (in -> out)
        wk_t = params["wk"][b].T
        wv_t = params["wv"][b].T
        wffn_t = params["wffn"][b].T
        mh, ph = [], []
        for hh in range(NUM_HEADS):
            sl = slice(hh * d, (hh + 1) * d)
            mh.append(mm(wq_t[:, sl], wk_t[:, sl].T))         # Wq_h Wk_hᵀ   [H,H]
            ph.append(mm(wv_t[:, sl], wffn_t[sl, :]))         # Wv_h Wffn_h  [H,H]
        m_blocks.append(jnp.stack(mh))
        p_blocks.append(jnp.stack(ph))

    wfuse = params["wfuse"]                                   # [H, 2H]
    return {
        "wh1_t": wh1_t, "wh2_t": wh2_t, "g0": g0, "g1": g1,
        "m": jnp.stack(m_blocks),                             # [blocks, heads, H, H]
        "p": jnp.stack(p_blocks),
        "wf0_t": wfuse[:, :H].T, "wf1_t": wfuse[:, H:].T,     # [H,H] each
    }


# ---------------------------------- wrapper ----------------------------------
def dgnn_forward(params, a_global, inputs_global, inputs_global_index):
    folded = fold_params(params)
    n = inputs_global.shape[0]
    h = HIDDEN
    b, s = inputs_global_index.shape

    ids = inputs_global.reshape(n, 1).astype(jnp.int32)
    idx = inputs_global_index.reshape(b * s, 1).astype(jnp.int32)

    operands = (
        ids, idx,
        params["embedding"].astype(jnp.float32),
        a_global.astype(jnp.float32),
        folded["wh1_t"], folded["wh2_t"], folded["g0"], folded["g1"],
        folded["m"], folded["p"], params["bffn"],
        folded["wf0_t"], folded["wf1_t"], params["bfuse"],
    )

    kernel = functools.partial(
        dgnn_kernel,
        num_heads=NUM_HEADS,
        num_blocks=NUM_ATT_BLOCKS,
        step=STEP_GLOBAL,
        fuse_a=FUSE_A,
    )

    out = pl.pallas_call(
        kernel,
        out_shape=jax.ShapeDtypeStruct((b * s, h), jnp.float32),
        grid=(1,),
        in_specs=[_full_spec(op.shape) for op in operands],
        out_specs=_full_spec((b * s, h)),
        compiler_params=pltpu.CompilerParams(
            dimension_semantics=("arbitrary",)),
    )(*operands)

    return out.reshape(b, s, h)                               # [BATCH, SEQ_LEN, H]


# ---------------------------------- pure-JAX reference (faithful to torch) ----------------------------------
def dgnn_reference(params, a_global, inputs_global, inputs_global_index):
    hp = jax.lax.Precision.HIGHEST
    mm = lambda a, b: jnp.matmul(a, b, precision=hp)

    hidden = jnp.take(params["embedding"], inputs_global, axis=0)
    n, h = hidden.shape
    d = h // NUM_HEADS

    a_fused = a_global
    if FUSE_A:
        corr = mm(hidden, hidden.T)
        corr = corr / jnp.linalg.norm(corr, axis=1, keepdims=True)
        a_fused = a_global + corr

    gnn_hidden = hidden
    for _ in range(STEP_GLOBAL):
        hw = mm(gnn_hidden, params["w_h"].T)
        hw0, hw1, hw2 = jnp.split(hw, 3, axis=-1)
        hf = mm(mm(a_fused, hw0), params["w_hf"].T)
        hf0, hf1 = jnp.split(hf, 2, axis=-1)
        gnn_hidden = hw2 + jnp.maximum(hf0 + hw1, 0.0) * hf1

    x = hidden
    for b in range(NUM_ATT_BLOCKS):
        q = mm(x, params["wq"][b].T).reshape(n, NUM_HEADS, d).transpose(1, 0, 2)
        k = mm(x, params["wk"][b].T).reshape(n, NUM_HEADS, d).transpose(1, 0, 2)
        v = mm(x, params["wv"][b].T).reshape(n, NUM_HEADS, d).transpose(1, 0, 2)
        score = jnp.tanh(jnp.einsum("hnd,hmd->hnm", q, k, precision=hp))
        att = jnp.einsum("hnm,hmd->hnd", score, v, precision=hp)
        att = att.transpose(1, 0, 2).reshape(n, h)
        att = jnp.maximum(mm(att, params["wffn"][b].T) + params["bffn"][b, 0], 0.0)
        x = x + att

    fused = mm(jnp.concatenate([gnn_hidden, x], axis=-1), params["wfuse"].T) + params["bfuse"][0]
    return fused[inputs_global_index]


# ---------------------------------- parameter init ----------------------------------
def init_params(key):
    stdv = 1.0 / math.sqrt(HIDDEN)
    u = lambda k, shape: jax.random.uniform(k, shape, jnp.float32, -stdv, stdv)
    ks = jax.random.split(key, 12)
    return {
        "embedding": u(ks[0], (N_NODE, HIDDEN)),
        "w_h":       u(ks[1], (3 * HIDDEN, HIDDEN)),
        "w_hf":      u(ks[2], (2 * HIDDEN, HIDDEN)),
        "wq":        u(ks[3], (NUM_ATT_BLOCKS, HIDDEN, HIDDEN)),
        "wk":        u(ks[4], (NUM_ATT_BLOCKS, HIDDEN, HIDDEN)),
        "wv":        u(ks[5], (NUM_ATT_BLOCKS, HIDDEN, HIDDEN)),
        "wffn":      u(ks[6], (NUM_ATT_BLOCKS, HIDDEN, HIDDEN)),
        "bffn":      u(ks[7], (NUM_ATT_BLOCKS, 1, HIDDEN)),
        "wfuse":     u(ks[8], (HIDDEN, 2 * HIDDEN)),
        "bfuse":     u(ks[9], (1, HIDDEN)),
    }


if __name__ == "__main__":
    key = jax.random.PRNGKey(0)
    k_par, k_a, k_in, k_idx = jax.random.split(key, 4)

    params = init_params(k_par)
    a_global = jax.random.uniform(k_a, (N_GLOBAL, N_GLOBAL), jnp.float32)
    inputs_global = jax.random.randint(k_in, (N_GLOBAL,), 0, N_NODE, dtype=jnp.int32)
    inputs_global_index = jax.random.randint(k_idx, (BATCH, SEQ_LEN), 0, N_GLOBAL, dtype=jnp.int32)

    out = dgnn_forward(params, a_global, inputs_global, inputs_global_index)
    out = jax.block_until_ready(out)

    ref = jax.block_until_ready(
        dgnn_reference(params, a_global, inputs_global, inputs_global_index))

    assert out.shape == (BATCH, SEQ_LEN, HIDDEN), out.shape
    assert bool(jnp.all(jnp.isfinite(out)))
    # f32 with MXU-default precision; tolerance matches that regime.
    if not jnp.allclose(out, ref, rtol=1e-2, atol=1e-2):
        raise AssertionError("Pallas kernel output mismatches pure-JAX reference")

    print("KERNEL_OK")
</pallas_src>

<mosaic_0001>
module attributes {stable_mosaic.version = 11 : i64} {
  func.func @dgnn_kernel(%arg0: i32, %arg1: memref<16x1xi32, #tpu.memory_space<vmem>>, %arg2: memref<16x1xi32, #tpu.memory_space<vmem>>, %arg3: memref<50x32xf32, #tpu.memory_space<vmem>>, %arg4: memref<16x16xf32, #tpu.memory_space<vmem>>, %arg5: memref<32x32xf32, #tpu.memory_space<vmem>>, %arg6: memref<32x32xf32, #tpu.memory_space<vmem>>, %arg7: memref<32x32xf32, #tpu.memory_space<vmem>>, %arg8: memref<32x32xf32, #tpu.memory_space<vmem>>, %arg9: memref<2x2x32x32xf32, #tpu.memory_space<vmem>>, %arg10: memref<2x2x32x32xf32, #tpu.memory_space<vmem>>, %arg11: memref<2x1x32xf32, #tpu.memory_space<vmem>>, %arg12: memref<32x32xf32, #tpu.memory_space<vmem>>, %arg13: memref<32x32xf32, #tpu.memory_space<vmem>>, %arg14: memref<1x32xf32, #tpu.memory_space<vmem>>, %arg15: memref<16x32xf32, #tpu.memory_space<vmem>>) attributes {dimension_semantics = [#tpu.dimension_semantics<arbitrary>], iteration_bounds = array<i64: 1>, scalar_prefetch = 0 : i64, scratch_operands = 0 : i64, tpu.core_type = #tpu.core_type<tc>, window_params = [{pipeline_mode = #tpu.pipeline_mode<synchronous>, transform_indices = @transform_0, window_bounds = array<i64: 16, 1>}, {pipeline_mode = #tpu.pipeline_mode<synchronous>, transform_indices = @transform_1, window_bounds = array<i64: 16, 1>}, {pipeline_mode = #tpu.pipeline_mode<synchronous>, transform_indices = @transform_2, window_bounds = array<i64: 50, 32>}, {pipeline_mode = #tpu.pipeline_mode<synchronous>, transform_indices = @transform_3, window_bounds = array<i64: 16, 16>}, {pipeline_mode = #tpu.pipeline_mode<synchronous>, transform_indices = @transform_4, window_bounds = array<i64: 32, 32>}, {pipeline_mode = #tpu.pipeline_mode<synchronous>, transform_indices = @transform_5, window_bounds = array<i64: 32, 32>}, {pipeline_mode = #tpu.pipeline_mode<synchronous>, transform_indices = @transform_6, window_bounds = array<i64: 32, 32>}, {pipeline_mode = #tpu.pipeline_mode<synchronous>, transform_indices = @transform_7, window_bounds = array<i64: 32, 32>}, {pipeline_mode = #tpu.pipeline_mode<synchronous>, transform_indices = @transform_8, window_bounds = array<i64: 2, 2, 32, 32>}, {pipeline_mode = #tpu.pipeline_mode<synchronous>, transform_indices = @transform_9, window_bounds = array<i64: 2, 2, 32, 32>}, {pipeline_mode = #tpu.pipeline_mode<synchronous>, transform_indices = @transform_10, window_bounds = array<i64: 2, 1, 32>}, {pipeline_mode = #tpu.pipeline_mode<synchronous>, transform_indices = @transform_11, window_bounds = array<i64: 32, 32>}, {pipeline_mode = #tpu.pipeline_mode<synchronous>, transform_indices = @transform_12, window_bounds = array<i64: 32, 32>}, {pipeline_mode = #tpu.pipeline_mode<synchronous>, transform_indices = @transform_13, window_bounds = array<i64: 1, 32>}, {pipeline_mode = #tpu.pipeline_mode<synchronous>, transform_indices = @transform_14, window_bounds = array<i64: 16, 32>}]} {
    %c0 = arith.constant 0 : index
    %c0_0 = arith.constant 0 : index
    %0 = vector.load %arg1[%c0, %c0_0] : memref<16x1xi32, #tpu.memory_space<vmem>>, vector<16x1xi32>
    %1 = tpu.iota {dimensions = array<i32: 1>} : vector<16x50xi32>
    %2 = vector.broadcast %0 : vector<16x1xi32> to vector<16x50xi32>
    %3 = arith.cmpi eq, %1, %2 : vector<16x50xi32>
    %4 = arith.extui %3 : vector<16x50xi1> to vector<16x50xi32>
    %5 = arith.sitofp %4 : vector<16x50xi32> to vector<16x50xf32>
    %c0_1 = arith.constant 0 : index
    %c0_2 = arith.constant 0 : index
    %6 = vector.load %arg3[%c0_1, %c0_2] : memref<50x32xf32, #tpu.memory_space<vmem>>, vector<50x32xf32>
    %cst = arith.constant dense<0.000000e+00> : vector<16x32xf32>
    %7 = tpu.matmul %5, %6, %cst {dimension_numbers = #tpu.dot_dimension_numbers<[1], [0], [0], [1], [0, 0, 1, 1], [], []>} : vector<16x50xf32>, vector<50x32xf32>, vector<16x32xf32> -> vector<16x32xf32>
    %c0_3 = arith.constant 0 : index
    %c0_4 = arith.constant 0 : index
    %8 = vector.load %arg4[%c0_3, %c0_4] : memref<16x16xf32, #tpu.memory_space<vmem>>, vector<16x16xf32>
    %cst_5 = arith.constant dense<0.000000e+00> : vector<16x16xf32>
    %9 = tpu.matmul %7, %7, %cst_5 {dimension_numbers = #tpu.dot_dimension_numbers<[1], [1], [0], [0], [0, 0, 1, 0], [], []>} : vector<16x32xf32>, vector<16x32xf32>, vector<16x16xf32> -> vector<16x16xf32>
    %10 = arith.mulf %9, %9 : vector<16x16xf32>
    %cst_6 = arith.constant dense<0.000000e+00> : vector<16xf32>
    %11 = vector.multi_reduction <add>, %10, %cst_6 [1] : vector<16x16xf32> to vector<16xf32>
    %12 = vector.shape_cast %11 : vector<16xf32> to vector<16x1xf32>
    %cst_7 = arith.constant 9.99999996E-13 : f32
    %13 = vector.broadcast %cst_7 : f32 to vector<16x1xf32>
    %14 = arith.addf %12, %13 : vector<16x1xf32>
    %15 = math.rsqrt %14 : vector<16x1xf32>
    %16 = vector.broadcast %15 : vector<16x1xf32> to vector<16x16xf32>
    %17 = arith.mulf %9, %16 : vector<16x16xf32>
    %18 = arith.addf %8, %17 : vector<16x16xf32>
    %cst_8 = arith.constant dense<0.000000e+00> : vector<16x32xf32>
    %19 = tpu.matmul %18, %7, %cst_8 {dimension_numbers = #tpu.dot_dimension_numbers<[1], [0], [0], [1], [0, 0, 1, 1], [], []>} : vector<16x16xf32>, vector<16x32xf32>, vector<16x32xf32> -> vector<16x32xf32>
    %c0_9 = arith.constant 0 : index
    %c0_10 = arith.constant 0 : index
    %20 = vector.load %arg7[%c0_9, %c0_10] : memref<32x32xf32, #tpu.memory_space<vmem>>, vector<32x32xf32>
    %cst_11 = arith.constant dense<0.000000e+00> : vector<16x32xf32>
    %21 = tpu.matmul %19, %20, %cst_11 {dimension_numbers = #tpu.dot_dimension_numbers<[1], [0], [0], [1], [0, 0, 1, 1], [], []>} : vector<16x32xf32>, vector<32x32xf32>, vector<16x32xf32> -> vector<16x32xf32>
    %c0_12 = arith.constant 0 : index
    %c0_13 = arith.constant 0 : index
    %22 = vector.load %arg8[%c0_12, %c0_13] : memref<32x32xf32, #tpu.memory_space<vmem>>, vector<32x32xf32>
    %cst_14 = arith.constant dense<0.000000e+00> : vector<16x32xf32>
    %23 = tpu.matmul %19, %22, %cst_14 {dimension_numbers = #tpu.dot_dimension_numbers<[1], [0], [0], [1], [0, 0, 1, 1], [], []>} : vector<16x32xf32>, vector<32x32xf32>, vector<16x32xf32> -> vector<16x32xf32>
    %c0_15 = arith.constant 0 : index
    %c0_16 = arith.constant 0 : index
    %24 = vector.load %arg5[%c0_15, %c0_16] : memref<32x32xf32, #tpu.memory_space<vmem>>, vector<32x32xf32>
    %cst_17 = arith.constant dense<0.000000e+00> : vector<16x32xf32>
    %25 = tpu.matmul %7, %24, %cst_17 {dimension_numbers = #tpu.dot_dimension_numbers<[1], [0], [0], [1], [0, 0, 1, 1], [], []>} : vector<16x32xf32>, vector<32x32xf32>, vector<16x32xf32> -> vector<16x32xf32>
    %c0_18 = arith.constant 0 : index
    %c0_19 = arith.constant 0 : index
    %26 = vector.load %arg6[%c0_18, %c0_19] : memref<32x32xf32, #tpu.memory_space<vmem>>, vector<32x32xf32>
    %cst_20 = arith.constant dense<0.000000e+00> : vector<16x32xf32>
    %27 = tpu.matmul %7, %26, %cst_20 {dimension_numbers = #tpu.dot_dimension_numbers<[1], [0], [0], [1], [0, 0, 1, 1], [], []>} : vector<16x32xf32>, vector<32x32xf32>, vector<16x32xf32> -> vector<16x32xf32>
    %28 = arith.addf %21, %25 : vector<16x32xf32>
    %cst_21 = arith.constant 0.000000e+00 : f32
    %29 = vector.broadcast %cst_21 : f32 to vector<16x32xf32>
    %30 = arith.maximumf %28, %29 : vector<16x32xf32>
    %31 = arith.mulf %30, %23 : vector<16x32xf32>
    %32 = arith.addf %27, %31 : vector<16x32xf32>
    %cst_22 = arith.constant 0.000000e+00 : f32
    %33 = vector.broadcast %cst_22 : f32 to vector<16x32xf32>
    %c0_23 = arith.constant 0 : index
    %c0_24 = arith.constant 0 : index
    %c0_25 = arith.constant 0 : index
    %c0_26 = arith.constant 0 : index
    %34 = vector.load %arg9[%c0_23, %c0_24, %c0_25, %c0_26] : memref<2x2x32x32xf32, #tpu.memory_space<vmem>>, vector<1x1x32x32xf32>
    %35 = vector.shape_cast %34 : vector<1x1x32x32xf32> to vector<32x32xf32>
    %cst_27 = arith.constant dense<0.000000e+00> : vector<16x32xf32>
    %36 = tpu.matmul %7, %35, %cst_27 {dimension_numbers = #tpu.dot_dimension_numbers<[1], [0], [0], [1], [0, 0, 1, 1], [], []>} : vector<16x32xf32>, vector<32x32xf32>, vector<16x32xf32> -> vector<16x32xf32>
    %cst_28 = arith.constant dense<0.000000e+00> : vector<16x16xf32>
    %37 = tpu.matmul %36, %7, %cst_28 {dimension_numbers = #tpu.dot_dimension_numbers<[1], [1], [0], [0], [0, 0, 1, 0], [], []>} : vector<16x32xf32>, vector<16x32xf32>, vector<16x16xf32> -> vector<16x16xf32>
    %38 = math.tanh %37 : vector<16x16xf32>
    %c0_29 = arith.constant 0 : index
    %c0_30 = arith.constant 0 : index
    %c0_31 = arith.constant 0 : index
    %c0_32 = arith.constant 0 : index
    %39 = vector.load %arg10[%c0_29, %c0_30, %c0_31, %c0_32] : memref<2x2x32x32xf32, #tpu.memory_space<vmem>>, vector<1x1x32x32xf32>
    %40 = vector.shape_cast %39 : vector<1x1x32x32xf32> to vector<32x32xf32>
    %cst_33 = arith.constant dense<0.000000e+00> : vector<16x32xf32>
    %41 = tpu.matmul %7, %40, %cst_33 {dimension_numbers = #tpu.dot_dimension_numbers<[1], [0], [0], [1], [0, 0, 1, 1], [], []>} : vector<16x32xf32>, vector<32x32xf32>, vector<16x32xf32> -> vector<16x32xf32>
    %cst_34 = arith.constant dense<0.000000e+00> : vector<16x32xf32>
    %42 = tpu.matmul %38, %41, %cst_34 {dimension_numbers = #tpu.dot_dimension_numbers<[1], [0], [0], [1], [0, 0, 1, 1], [], []>} : vector<16x16xf32>, vector<16x32xf32>, vector<16x32xf32> -> vector<16x32xf32>
    %43 = arith.addf %33, %42 : vector<16x32xf32>
    %c0_35 = arith.constant 0 : index
    %c1 = arith.constant 1 : index
    %c0_36 = arith.constant 0 : index
    %c0_37 = arith.constant 0 : index
    %44 = vector.load %arg9[%c0_35, %c1, %c0_36, %c0_37] : memref<2x2x32x32xf32, #tpu.memory_space<vmem>>, vector<1x1x32x32xf32>
    %45 = vector.shape_cast %44 : vector<1x1x32x32xf32> to vector<32x32xf32>
    %cst_38 = arith.constant dense<0.000000e+00> : vector<16x32xf32>
    %46 = tpu.matmul %7, %45, %cst_38 {dimension_numbers = #tpu.dot_dimension_numbers<[1], [0], [0], [1], [0, 0, 1, 1], [], []>} : vector<16x32xf32>, vector<32x32xf32>, vector<16x32xf32> -> vector<16x32xf32>
    %cst_39 = arith.constant dense<0.000000e+00> : vector<16x16xf32>
    %47 = tpu.matmul %46, %7, %cst_39 {dimension_numbers = #tpu.dot_dimension_numbers<[1], [1], [0], [0], [0, 0, 1, 0], [], []>} : vector<16x32xf32>, vector<16x32xf32>, vector<16x16xf32> -> vector<16x16xf32>
    %48 = math.tanh %47 : vector<16x16xf32>
    %c0_40 = arith.constant 0 : index
    %c1_41 = arith.constant 1 : index
    %c0_42 = arith.constant 0 : index
    %c0_43 = arith.constant 0 : index
    %49 = vector.load %arg10[%c0_40, %c1_41, %c0_42, %c0_43] : memref<2x2x32x32xf32, #tpu.memory_space<vmem>>, vector<1x1x32x32xf32>
    %50 = vector.shape_cast %49 : vector<1x1x32x32xf32> to vector<32x32xf32>
    %cst_44 = arith.constant dense<0.000000e+00> : vector<16x32xf32>
    %51 = tpu.matmul %7, %50, %cst_44 {dimension_numbers = #tpu.dot_dimension_numbers<[1], [0], [0], [1], [0, 0, 1, 1], [], []>} : vector<16x32xf32>, vector<32x32xf32>, vector<16x32xf32> -> vector<16x32xf32>
    %cst_45 = arith.constant dense<0.000000e+00> : vector<16x32xf32>
    %52 = tpu.matmul %48, %51, %cst_45 {dimension_numbers = #tpu.dot_dimension_numbers<[1], [0], [0], [1], [0, 0, 1, 1], [], []>} : vector<16x16xf32>, vector<16x32xf32>, vector<16x32xf32> -> vector<16x32xf32>
    %53 = arith.addf %43, %52 : vector<16x32xf32>
    %c0_46 = arith.constant 0 : index
    %c0_47 = arith.constant 0 : index
    %c0_48 = arith.constant 0 : index
    %54 = vector.load %arg11[%c0_46, %c0_47, %c0_48] : memref<2x1x32xf32, #tpu.memory_space<vmem>>, vector<1x1x32xf32>
    %55 = vector.shape_cast %54 : vector<1x1x32xf32> to vector<1x32xf32>
    %56 = vector.broadcast %55 : vector<1x32xf32> to vector<16x32xf32>
    %57 = arith.addf %53, %56 : vector<16x32xf32>
    %cst_49 = arith.constant 0.000000e+00 : f32
    %58 = vector.broadcast %cst_49 : f32 to vector<16x32xf32>
    %59 = arith.maximumf %57, %58 : vector<16x32xf32>
    %60 = arith.addf %7, %59 : vector<16x32xf32>
    %cst_50 = arith.constant 0.000000e+00 : f32
    %61 = vector.broadcast %cst_50 : f32 to vector<16x32xf32>
    %c1_51 = arith.constant 1 : index
    %c0_52 = arith.constant 0 : index
    %c0_53 = arith.constant 0 : index
    %c0_54 = arith.constant 0 : index
    %62 = vector.load %arg9[%c1_51, %c0_52, %c0_53, %c0_54] : memref<2x2x32x32xf32, #tpu.memory_space<vmem>>, vector<1x1x32x32xf32>
    %63 = vector.shape_cast %62 : vector<1x1x32x32xf32> to vector<32x32xf32>
    %cst_55 = arith.constant dense<0.000000e+00> : vector<16x32xf32>
    %64 = tpu.matmul %60, %63, %cst_55 {dimension_numbers = #tpu.dot_dimension_numbers<[1], [0], [0], [1], [0, 0, 1, 1], [], []>} : vector<16x32xf32>, vector<32x32xf32>, vector<16x32xf32> -> vector<16x32xf32>
    %cst_56 = arith.constant dense<0.000000e+00> : vector<16x16xf32>
    %65 = tpu.matmul %64, %60, %cst_56 {dimension_numbers = #tpu.dot_dimension_numbers<[1], [1], [0], [0], [0, 0, 1, 0], [], []>} : vector<16x32xf32>, vector<16x32xf32>, vector<16x16xf32> -> vector<16x16xf32>
    %66 = math.tanh %65 : vector<16x16xf32>
    %c1_57 = arith.constant 1 : index
    %c0_58 = arith.constant 0 : index
    %c0_59 = arith.constant 0 : index
    %c0_60 = arith.constant 0 : index
    %67 = vector.load %arg10[%c1_57, %c0_58, %c0_59, %c0_60] : memref<2x2x32x32xf32, #tpu.memory_space<vmem>>, vector<1x1x32x32xf32>
    %68 = vector.shape_cast %67 : vector<1x1x32x32xf32> to vector<32x32xf32>
    %cst_61 = arith.constant dense<0.000000e+00> : vector<16x32xf32>
    %69 = tpu.matmul %60, %68, %cst_61 {dimension_numbers = #tpu.dot_dimension_numbers<[1], [0], [0], [1], [0, 0, 1, 1], [], []>} : vector<16x32xf32>, vector<32x32xf32>, vector<16x32xf32> -> vector<16x32xf32>
    %cst_62 = arith.constant dense<0.000000e+00> : vector<16x32xf32>
    %70 = tpu.matmul %66, %69, %cst_62 {dimension_numbers = #tpu.dot_dimension_numbers<[1], [0], [0], [1], [0, 0, 1, 1], [], []>} : vector<16x16xf32>, vector<16x32xf32>, vector<16x32xf32> -> vector<16x32xf32>
    %71 = arith.addf %61, %70 : vector<16x32xf32>
    %c1_63 = arith.constant 1 : index
    %c1_64 = arith.constant 1 : index
    %c0_65 = arith.constant 0 : index
    %c0_66 = arith.constant 0 : index
    %72 = vector.load %arg9[%c1_63, %c1_64, %c0_65, %c0_66] : memref<2x2x32x32xf32, #tpu.memory_space<vmem>>, vector<1x1x32x32xf32>
    %73 = vector.shape_cast %72 : vector<1x1x32x32xf32> to vector<32x32xf32>
    %cst_67 = arith.constant dense<0.000000e+00> : vector<16x32xf32>
    %74 = tpu.matmul %60, %73, %cst_67 {dimension_numbers = #tpu.dot_dimension_numbers<[1], [0], [0], [1], [0, 0, 1, 1], [], []>} : vector<16x32xf32>, vector<32x32xf32>, vector<16x32xf32> -> vector<16x32xf32>
    %cst_68 = arith.constant dense<0.000000e+00> : vector<16x16xf32>
    %75 = tpu.matmul %74, %60, %cst_68 {dimension_numbers = #tpu.dot_dimension_numbers<[1], [1], [0], [0], [0, 0, 1, 0], [], []>} : vector<16x32xf32>, vector<16x32xf32>, vector<16x16xf32> -> vector<16x16xf32>
    %76 = math.tanh %75 : vector<16x16xf32>
    %c1_69 = arith.constant 1 : index
    %c1_70 = arith.constant 1 : index
    %c0_71 = arith.constant 0 : index
    %c0_72 = arith.constant 0 : index
    %77 = vector.load %arg10[%c1_69, %c1_70, %c0_71, %c0_72] : memref<2x2x32x32xf32, #tpu.memory_space<vmem>>, vector<1x1x32x32xf32>
    %78 = vector.shape_cast %77 : vector<1x1x32x32xf32> to vector<32x32xf32>
    %cst_73 = arith.constant dense<0.000000e+00> : vector<16x32xf32>
    %79 = tpu.matmul %60, %78, %cst_73 {dimension_numbers = #tpu.dot_dimension_numbers<[1], [0], [0], [1], [0, 0, 1, 1], [], []>} : vector<16x32xf32>, vector<32x32xf32>, vector<16x32xf32> -> vector<16x32xf32>
    %cst_74 = arith.constant dense<0.000000e+00> : vector<16x32xf32>
    %80 = tpu.matmul %76, %79, %cst_74 {dimension_numbers = #tpu.dot_dimension_numbers<[1], [0], [0], [1], [0, 0, 1, 1], [], []>} : vector<16x16xf32>, vector<16x32xf32>, vector<16x32xf32> -> vector<16x32xf32>
    %81 = arith.addf %71, %80 : vector<16x32xf32>
    %c1_75 = arith.constant 1 : index
    %c0_76 = arith.constant 0 : index
    %c0_77 = arith.constant 0 : index
    %82 = vector.load %arg11[%c1_75, %c0_76, %c0_77] : memref<2x1x32xf32, #tpu.memory_space<vmem>>, vector<1x1x32xf32>
    %83 = vector.shape_cast %82 : vector<1x1x32xf32> to vector<1x32xf32>
    %84 = vector.broadcast %83 : vector<1x32xf32> to vector<16x32xf32>
    %85 = arith.addf %81, %84 : vector<16x32xf32>
    %cst_78 = arith.constant 0.000000e+00 : f32
    %86 = vector.broadcast %cst_78 : f32 to vector<16x32xf32>
    %87 = arith.maximumf %85, %86 : vector<16x32xf32>
    %88 = arith.addf %60, %87 : vector<16x32xf32>
    %c0_79 = arith.constant 0 : index
    %c0_80 = arith.constant 0 : index
    %89 = vector.load %arg12[%c0_79, %c0_80] : memref<32x32xf32, #tpu.memory_space<vmem>>, vector<32x32xf32>
    %cst_81 = arith.constant dense<0.000000e+00> : vector<16x32xf32>
    %90 = tpu.matmul %32, %89, %cst_81 {dimension_numbers = #tpu.dot_dimension_numbers<[1], [0], [0], [1], [0, 0, 1, 1], [], []>} : vector<16x32xf32>, vector<32x32xf32>, vector<16x32xf32> -> vector<16x32xf32>
    %c0_82 = arith.constant 0 : index
    %c0_83 = arith.constant 0 : index
    %91 = vector.load %arg13[%c0_82, %c0_83] : memref<32x32xf32, #tpu.memory_space<vmem>>, vector<32x32xf32>
    %cst_84 = arith.constant dense<0.000000e+00> : vector<16x32xf32>
    %92 = tpu.matmul %88, %91, %cst_84 {dimension_numbers = #tpu.dot_dimension_numbers<[1], [0], [0], [1], [0, 0, 1, 1], [], []>} : vector<16x32xf32>, vector<32x32xf32>, vector<16x32xf32> -> vector<16x32xf32>
    %93 = arith.addf %90, %92 : vector<16x32xf32>
    %c0_85 = arith.constant 0 : index
    %c0_86 = arith.constant 0 : index
    %94 = vector.load %arg14[%c0_85, %c0_86] : memref<1x32xf32, #tpu.memory_space<vmem>>, vector<1x32xf32>
    %95 = vector.broadcast %94 : vector<1x32xf32> to vector<16x32xf32>
    %96 = arith.addf %93, %95 : vector<16x32xf32>
    %c0_87 = arith.constant 0 : index
    %c0_88 = arith.constant 0 : index
    %97 = vector.load %arg2[%c0_87, %c0_88] : memref<16x1xi32, #tpu.memory_space<vmem>>, vector<16x1xi32>
    %98 = tpu.iota {dimensions = array<i32: 1>} : vector<16x16xi32>
    %99 = vector.broadcast %97 : vector<16x1xi32> to vector<16x16xi32>
    %100 = arith.cmpi eq, %98, %99 : vector<16x16xi32>
    %101 = arith.extui %100 : vector<16x16xi1> to vector<16x16xi32>
    %102 = arith.sitofp %101 : vector<16x16xi32> to vector<16x16xf32>
    %cst_89 = arith.constant dense<0.000000e+00> : vector<16x32xf32>
    %103 = tpu.matmul %102, %96, %cst_89 {dimension_numbers = #tpu.dot_dimension_numbers<[1], [0], [0], [1], [0, 0, 1, 1], [], []>} : vector<16x16xf32>, vector<16x32xf32>, vector<16x32xf32> -> vector<16x32xf32>
    %c0_90 = arith.constant 0 : index
    %c0_91 = arith.constant 0 : index
    %104 = vector.load %arg15[%c0_90, %c0_91] : memref<16x32xf32, #tpu.memory_space<vmem>>, vector<16x32xf32>
    tpu.vector_store %arg15[%c0_90, %c0_91], %103 {strides = array<i32>} : memref<16x32xf32, #tpu.memory_space<vmem>>, vector<16x32xf32>,
    return
  }
  func.func @transform_0(%arg0: i32) -> (i32, i32) {
    %c0_i32 = arith.constant 0 : i32
    %c0_i32_0 = arith.constant 0 : i32
    %c0_i32_1 = arith.constant 0 : i32
    return %c0_i32, %c0_i32_0 : i32, i32
  }
  func.func @transform_1(%arg0: i32) -> (i32, i32) {
    %c0_i32 = arith.constant 0 : i32
    %c0_i32_0 = arith.constant 0 : i32
    %c0_i32_1 = arith.constant 0 : i32
    return %c0_i32, %c0_i32_0 : i32, i32
  }
  func.func @transform_2(%arg0: i32) -> (i32, i32) {
    %c0_i32 = arith.constant 0 : i32
    %c0_i32_0 = arith.constant 0 : i32
    %c0_i32_1 = arith.constant 0 : i32
    return %c0_i32, %c0_i32_0 : i32, i32
  }
  func.func @transform_3(%arg0: i32) -> (i32, i32) {
    %c0_i32 = arith.constant 0 : i32
    %c0_i32_0 = arith.constant 0 : i32
    %c0_i32_1 = arith.constant 0 : i32
    return %c0_i32, %c0_i32_0 : i32, i32
  }
  func.func @transform_4(%arg0: i32) -> (i32, i32) {
    %c0_i32 = arith.constant 0 : i32
    %c0_i32_0 = arith.constant 0 : i32
    %c0_i32_1 = arith.constant 0 : i32
    return %c0_i32, %c0_i32_0 : i32, i32
  }
  func.func @transform_5(%arg0: i32) -> (i32, i32) {
    %c0_i32 = arith.constant 0 : i32
    %c0_i32_0 = arith.constant 0 : i32
    %c0_i32_1 = arith.constant 0 : i32
    return %c0_i32, %c0_i32_0 : i32, i32
  }
  func.func @transform_6(%arg0: i32) -> (i32, i32) {
    %c0_i32 = arith.constant 0 : i32
    %c0_i32_0 = arith.constant 0 : i32
    %c0_i32_1 = arith.constant 0 : i32
    return %c0_i32, %c0_i32_0 : i32, i32
  }
  func.func @transform_7(%arg0: i32) -> (i32, i32) {
    %c0_i32 = arith.constant 0 : i32
    %c0_i32_0 = arith.constant 0 : i32
    %c0_i32_1 = arith.constant 0 : i32
    return %c0_i32, %c0_i32_0 : i32, i32
  }
  func.func @transform_8(%arg0: i32) -> (i32, i32, i32, i32) {
    %c0_i32 = arith.constant 0 : i32
    %c0_i32_0 = arith.constant 0 : i32
    %c0_i32_1 = arith.constant 0 : i32
    %c0_i32_2 = arith.constant 0 : i32
    %c0_i32_3 = arith.constant 0 : i32
    return %c0_i32, %c0_i32_0, %c0_i32_1, %c0_i32_2 : i32, i32, i32, i32
  }
  func.func @transform_9(%arg0: i32) -> (i32, i32, i32, i32) {
    %c0_i32 = arith.constant 0 : i32
    %c0_i32_0 = arith.constant 0 : i32
    %c0_i32_1 = arith.constant 0 : i32
    %c0_i32_2 = arith.constant 0 : i32
    %c0_i32_3 = arith.constant 0 : i32
    return %c0_i32, %c0_i32_0, %c0_i32_1, %c0_i32_2 : i32, i32, i32, i32
  }
  func.func @transform_10(%arg0: i32) -> (i32, i32, i32) {
    %c0_i32 = arith.constant 0 : i32
    %c0_i32_0 = arith.constant 0 : i32
    %c0_i32_1 = arith.constant 0 : i32
    %c0_i32_2 = arith.constant 0 : i32
    return %c0_i32, %c0_i32_0, %c0_i32_1 : i32, i32, i32
  }
  func.func @transform_11(%arg0: i32) -> (i32, i32) {
    %c0_i32 = arith.constant 0 : i32
    %c0_i32_0 = arith.constant 0 : i32
    %c0_i32_1 = arith.constant 0 : i32
    return %c0_i32, %c0_i32_0 : i32, i32
  }
  func.func @transform_12(%arg0: i32) -> (i32, i32) {
    %c0_i32 = arith.constant 0 : i32
    %c0_i32_0 = arith.constant 0 : i32
    %c0_i32_1 = arith.constant 0 : i32
    return %c0_i32, %c0_i32_0 : i32, i32
  }
  func.func @transform_13(%arg0: i32) -> (i32, i32) {
    %c0_i32 = arith.constant 0 : i32
    %c0_i32_0 = arith.constant 0 : i32
    %c0_i32_1 = arith.constant 0 : i32
    return %c0_i32, %c0_i32_0 : i32, i32
  }
  func.func @transform_14(%arg0: i32) -> (i32, i32) {
    %c0_i32 = arith.constant 0 : i32
    %c0_i32_0 = arith.constant 0 : i32
    %c0_i32_1 = arith.constant 0 : i32
    return %c0_i32, %c0_i32_0 : i32, i32
  }
}

</mosaic_0001>

<llo_original>
// kernel: tpu_custom_call.1
$region0: #{tpu_custom_call.1}
  #allocation0 [shape = 'u32[]', space=smem, size = 0x4, offset = 0x4, fixed_abs, tag = 'smem constant byte address 0x4 - core index']
  #allocation1 [shape = 'u32[144,128]{1,0:T(1,128)}', space=vmem, size = 0x12000, scoped, tag = 'internal scratch']
  %s0 = inlined_call_operand.vmem [shape: s32[16,1], index: 0, kind: input, shape index: {}]
  %s1 = inlined_call_operand.vmem [shape: s32[16,1], index: 1, kind: input, shape index: {}]
  %s2 = inlined_call_operand.vmem [shape: f32[50,32], index: 2, kind: input, shape index: {}]
  %s3 = inlined_call_operand.hbm [shape: f32[16,16], index: 3, kind: input, shape index: {}]
  %s4 = inlined_call_operand.hbm [shape: f32[32,32], index: 4, kind: input, shape index: {}]
  %s5 = inlined_call_operand.hbm [shape: f32[32,32], index: 5, kind: input, shape index: {}]
  %s6 = inlined_call_operand.hbm [shape: f32[32,32], index: 6, kind: input, shape index: {}]
  %s7 = inlined_call_operand.hbm [shape: f32[32,32], index: 7, kind: input, shape index: {}]
  %s8 = inlined_call_operand.vmem [shape: f32[2,2,32,32], index: 8, kind: input, shape index: {}]
  %s9 = inlined_call_operand.hbm [shape: f32[2,2,32,32], index: 9, kind: input, shape index: {}]
  %s10 = inlined_call_operand.vmem [shape: f32[2,1,32], index: 10, kind: input, shape index: {}]
  %s11 = inlined_call_operand.vmem [shape: f32[32,32], index: 11, kind: input, shape index: {}]
  %s12 = inlined_call_operand.hbm [shape: f32[32,32], index: 12, kind: input, shape index: {}]
  %s13 = inlined_call_operand.vmem [shape: f32[1,32], index: 13, kind: input, shape index: {}]
  %s14 = inlined_call_operand.hbm [shape: f32[16,32], index: 14, kind: output, shape index: {}]
  %s15 = sld [smem:[#allocation0]]
  $region94: #{tpu_custom_call.1} parent=0
    _
  %s17 = ssub.s32 1, %s15
  %s18 = scalar_select 0, %s17, %s15
  $region1: #{tpu_custom_call.1} parent=0
    #allocation2 [shape = 'u8[8192]{0}', space=vmem, size = 0x2000, scoped, tag = 'input window, operand 3, single buffered']
    #allocation3 [shape = 's32[1]{0}', space=sflag, size = 0x4, scoped, tag = 'scoped memory for tpu_custom_call.1']
    #allocation4 [shape = 's32[1]{0}', space=sflag, size = 0x4, scoped, tag = 'scoped memory for tpu_custom_call.1']
    #allocation5 [shape = 'u8[16384]{0}', space=vmem, size = 0x4000, scoped, tag = 'input window, operand 4, single buffered']
    #allocation6 [shape = 's32[1]{0}', space=sflag, size = 0x4, scoped, tag = 'scoped memory for tpu_custom_call.1']
    #allocation7 [shape = 'u8[16384]{0}', space=vmem, size = 0x4000, scoped, tag = 'input window, operand 5, single buffered']
    #allocation8 [shape = 'u8[16384]{0}', space=vmem, size = 0x4000, scoped, tag = 'input window, operand 6, single buffered']
    #allocation9 [shape = 's32[1]{0}', space=sflag, size = 0x4, scoped, tag = 'scoped memory for tpu_custom_call.1']
    #allocation10 [shape = 'u8[16384]{0}', space=vmem, size = 0x4000, scoped, tag = 'input window, operand 7, single buffered']
    #allocation11 [shape = 'u8[65536]{0}', space=vmem, size = 0x10000, scoped, tag = 'input window, operand 9, single buffered']
    #allocation12 [shape = 's32[1]{0}', space=sflag, size = 0x4, scoped, tag = 'scoped memory for tpu_custom_call.1']
    #allocation13 [shape = 'u8[16384]{0}', space=vmem, size = 0x4000, scoped, tag = 'input window, operand 12, single buffered']
    #allocation14 [shape = 'u8[8192]{0}', space=vmem, size = 0x2000, scoped, tag = 'output window, operand 0, single buffered']
    %19 = vsyncpa [#allocation3], 0
    %20 = vsyncpa [#allocation6], 0
    %21 = vsyncpa [#allocation9], 0
    %22 = vsyncpa [#allocation12], 0
    %23 = vsyncpa [#allocation4], 0
    // Predicated region
    $region2: #{tpu_custom_call.1} parent=1 // pred_check
      _
    $region3: #{tpu_custom_call.1} parent=1 // pred_check_branch
      %25 = sbr.rel (0) target = $region5
    $region4: #{tpu_custom_call.1} parent=1 // pred_region
      _
    $region5: #{tpu_custom_call.1} parent=1 // pred_fallthru
      _
    // Predicated region
    $region6: #{tpu_custom_call.1} parent=1 // pred_check
      _
    $region7: #{tpu_custom_call.1} parent=1 // pred_check_branch
      %27 = sbr.rel (0) target = $region9
    $region8: #{tpu_custom_call.1} parent=1 // pred_region
      _
    $region9: #{tpu_custom_call.1} parent=1 // pred_fallthru
      _
    // Predicated region
    $region10: #{tpu_custom_call.1} parent=1 // pred_check
      _
    $region11: #{tpu_custom_call.1} parent=1 // pred_check_branch
      %29 = sbr.rel (0) target = $region13
    $region12: #{tpu_custom_call.1} parent=1 // pred_region
      _
    $region13: #{tpu_custom_call.1} parent=1 // pred_fallthru
      _
    // Predicated region
    $region14: #{tpu_custom_call.1} parent=1 // pred_check
      _
    $region15: #{tpu_custom_call.1} parent=1 // pred_check_branch
      %31 = sbr.rel (0) target = $region17
    $region16: #{tpu_custom_call.1} parent=1 // pred_region
      %s33 = ssub.s32 256, 256
      %34 = vsyncadd [#allocation3], %s33
      %s35 = sshll.u32 [#allocation2], 4
      %s36 = int_to_ptr.vmem [resolvable:$true] %s35
      %41 = dma.hbm_to_vmem [thread:$0]  %s3, 256, %s36, [#allocation3], 128, 128, 8
    $region17: #{tpu_custom_call.1} parent=1 // pred_fallthru
      _
    // Predicated region
    $region18: #{tpu_custom_call.1} parent=1 // pred_check
      _
    $region19: #{tpu_custom_call.1} parent=1 // pred_check_branch
      %43 = sbr.rel (0) target = $region21
    $region20: #{tpu_custom_call.1} parent=1 // pred_region
      %s45 = ssub.s32 512, 512
      %46 = vsyncadd [#allocation6], %s45
      %s47 = sshll.u32 [#allocation5], 4
      %s48 = int_to_ptr.vmem [resolvable:$true] %s47
      %53 = dma.hbm_to_vmem [thread:$0]  %s4, 512, %s48, [#allocation6], 128, 128, 8
    $region21: #{tpu_custom_call.1} parent=1 // pred_fallthru
      _
    // Predicated region
    $region22: #{tpu_custom_call.1} parent=1 // pred_check
      _
    $region23: #{tpu_custom_call.1} parent=1 // pred_check_branch
      %55 = sbr.rel (0) target = $region25
    $region24: #{tpu_custom_call.1} parent=1 // pred_region
      %s57 = ssub.s32 512, 512
      %58 = vsyncadd [#allocation6], %s57
      %s59 = sshll.u32 [#allocation7], 4
      %s60 = int_to_ptr.vmem [resolvable:$true] %s59
      %65 = dma.hbm_to_vmem [thread:$0]  %s5, 512, %s60, [#allocation6], 128, 128, 8
    $region25: #{tpu_custom_call.1} parent=1 // pred_fallthru
      _
    // Predicated region
    $region26: #{tpu_custom_call.1} parent=1 // pred_check
      _
    $region27: #{tpu_custom_call.1} parent=1 // pred_check_branch
      %67 = sbr.rel (0) target = $region29
    $region28: #{tpu_custom_call.1} parent=1 // pred_region
      %s69 = ssub.s32 512, 512
      %70 = vsyncadd [#allocation9], %s69
      %s71 = sshll.u32 [#allocation8], 4
      %s72 = int_to_ptr.vmem [resolvable:$true] %s71
      %77 = dma.hbm_to_vmem [thread:$0]  %s6, 512, %s72, [#allocation9], 128, 128, 8
    $region29: #{tpu_custom_call.1} parent=1 // pred_fallthru
      _
    // Predicated region
    $region30: #{tpu_custom_call.1} parent=1 // pred_check
      _
    $region31: #{tpu_custom_call.1} parent=1 // pred_check_branch
      %79 = sbr.rel (0) target = $region33
    $region32: #{tpu_custom_call.1} parent=1 // pred_region
      %s81 = ssub.s32 512, 512
      %82 = vsyncadd [#allocation9], %s81
      %s83 = sshll.u32 [#allocation10], 4
      %s84 = int_to_ptr.vmem [resolvable:$true] %s83
      %89 = dma.hbm_to_vmem [thread:$0]  %s7, 512, %s84, [#allocation9], 128, 128, 8
    $region33: #{tpu_custom_call.1} parent=1 // pred_fallthru
      _
    // Predicated region
    $region34: #{tpu_custom_call.1} parent=1 // pred_check
      _
    $region35: #{tpu_custom_call.1} parent=1 // pred_check_branch
      %91 = sbr.rel (0) target = $region37
    $region36: #{tpu_custom_call.1} parent=1 // pred_region
      _
    $region37: #{tpu_custom_call.1} parent=1 // pred_fallthru
      _
    // Predicated region
    $region38: #{tpu_custom_call.1} parent=1 // pred_check
      _
    $region39: #{tpu_custom_call.1} parent=1 // pred_check_branch
      %93 = sbr.rel (0) target = $region41
    $region40: #{tpu_custom_call.1} parent=1 // pred_region
      %s95 = ssub.s32 2048, 2048
      %96 = vsyncadd [#allocation12], %s95
      %s97 = sshll.u32 [#allocation11], 4
      %s98 = int_to_ptr.vmem [resolvable:$true] %s97
      %103 = dma.hbm_to_vmem [thread:$0]  %s9, 2048, %s98, [#allocation12], 128, 128, 8
    $region41: #{tpu_custom_call.1} parent=1 // pred_fallthru
      _
    // Predicated region
    $region42: #{tpu_custom_call.1} parent=1 // pred_check
      _
    $region43: #{tpu_custom_call.1} parent=1 // pred_check_branch
      %105 = sbr.rel (0) target = $region45
    $region44: #{tpu_custom_call.1} parent=1 // pred_region
      _
    $region45: #{tpu_custom_call.1} parent=1 // pred_fallthru
      _
    // Predicated region
    $region46: #{tpu_custom_call.1} parent=1 // pred_check
      _
    $region47: #{tpu_custom_call.1} parent=1 // pred_check_branch
      %107 = sbr.rel (0) target = $region49
    $region48: #{tpu_custom_call.1} parent=1 // pred_region
      _
    $region49: #{tpu_custom_call.1} parent=1 // pred_fallthru
      _
    // Predicated region
    $region50: #{tpu_custom_call.1} parent=1 // pred_check
      _
    $region51: #{tpu_custom_call.1} parent=1 // pred_check_branch
      %109 = sbr.rel (0) target = $region53
    $region52: #{tpu_custom_call.1} parent=1 // pred_region
      %s111 = ssub.s32 512, 512
      %112 = vsyncadd [#allocation12], %s111
      %s113 = sshll.u32 [#allocation13], 4
      %s114 = int_to_ptr.vmem [resolvable:$true] %s113
      %119 = dma.hbm_to_vmem [thread:$0]  %s12, 512, %s114, [#allocation12], 128, 128, 8
    $region53: #{tpu_custom_call.1} parent=1 // pred_fallthru
      _
    // Predicated region
    $region54: #{tpu_custom_call.1} parent=1 // pred_check
      _
    $region55: #{tpu_custom_call.1} parent=1 // pred_check_branch
      %121 = sbr.rel (0) target = $region57
    $region56: #{tpu_custom_call.1} parent=1 // pred_region
      _
    $region57: #{tpu_custom_call.1} parent=1 // pred_fallthru
      _
    // Predicated region
    $region58: #{tpu_custom_call.1} parent=1 // pred_check
      _
    $region59: #{tpu_custom_call.1} parent=1 // pred_check_branch
      %123 = sbr.rel (0) target = $region61
    $region60: #{tpu_custom_call.1} parent=1 // pred_region
      %124 = dma.done [#allocation3], 256
    $region61: #{tpu_custom_call.1} parent=1 // pred_fallthru
      _
    // Predicated region
    $region62: #{tpu_custom_call.1} parent=1 // pred_check
      _
    $region63: #{tpu_custom_call.1} parent=1 // pred_check_branch
      %126 = sbr.rel (0) target = $region65
    $region64: #{tpu_custom_call.1} parent=1 // pred_region
      %127 = dma.done [#allocation6], 512
    $region65: #{tpu_custom_call.1} parent=1 // pred_fallthru
      _
    // Predicated region
    $region66: #{tpu_custom_call.1} parent=1 // pred_check
      _
    $region67: #{tpu_custom_call.1} parent=1 // pred_check_branch
      %129 = sbr.rel (0) target = $region69
    $region68: #{tpu_custom_call.1} parent=1 // pred_region
      %130 = dma.done [#allocation6], 512
    $region69: #{tpu_custom_call.1} parent=1 // pred_fallthru
      _
    // Predicated region
    $region70: #{tpu_custom_call.1} parent=1 // pred_check
      _
    $region71: #{tpu_custom_call.1} parent=1 // pred_check_branch
      %132 = sbr.rel (0) target = $region73
    $region72: #{tpu_custom_call.1} parent=1 // pred_region
      %133 = dma.done [#allocation9], 512
    $region73: #{tpu_custom_call.1} parent=1 // pred_fallthru
      _
    // Predicated region
    $region74: #{tpu_custom_call.1} parent=1 // pred_check
      _
    $region75: #{tpu_custom_call.1} parent=1 // pred_check_branch
      %135 = sbr.rel (0) target = $region77
    $region76: #{tpu_custom_call.1} parent=1 // pred_region
      %136 = dma.done [#allocation9], 512
    $region77: #{tpu_custom_call.1} parent=1 // pred_fallthru
      _
    // Predicated region
    $region78: #{tpu_custom_call.1} parent=1 // pred_check
      _
    $region79: #{tpu_custom_call.1} parent=1 // pred_check_branch
      %138 = sbr.rel (0) target = $region81
    $region80: #{tpu_custom_call.1} parent=1 // pred_region
      %139 = dma.done [#allocation12], 2048
    $region81: #{tpu_custom_call.1} parent=1 // pred_fallthru
      _
    // Predicated region
    $region82: #{tpu_custom_call.1} parent=1 // pred_check
      _
    $region83: #{tpu_custom_call.1} parent=1 // pred_check_branch
      %141 = sbr.rel (0) target = $region85
    $region84: #{tpu_custom_call.1} parent=1 // pred_region
      %142 = dma.done [#allocation12], 512
    $region85: #{tpu_custom_call.1} parent=1 // pred_fallthru
      _
    %v143 = vld [vmem:[%s0] sm:$0xff]
    %v144 = vld [vmem:[%s0 + $0x8] sm:$0xff]
    %v145 = vlaneseq
    %v146 = vand.u32 %v145, 127
    %147 = vset.pattern.permute.xlu0 0
    %148 = vperm.xlu0 %147, %v143
    %v149 = vpop.permute.xlu0 %148
    %150 = vset.pattern.permute.xlu0 0
    %151 = vperm.xlu0 %150, %v144
    %v152 = vpop.permute.xlu0 %151
    %vm153 = vcmp.eq.s32.totalorder %v146, %v149
    %vm154 = vcmp.eq.s32.totalorder %v146, %v152
    %v155 = vsel %vm153, 1, 0
    %v156 = vsel %vm154, 1, 0
    %v157 = vcvt.s32.f32 %v155
    %v158 = vcvt.s32.f32 %v156
    %v159 = vld [vmem:[%s2] sm:$0xff]
    %v160 = vld [vmem:[%s2 + $0x8] sm:$0xff]
    %v161 = vld [vmem:[%s2 + $0x10] sm:$0xff]
    %v162 = vld [vmem:[%s2 + $0x18] sm:$0xff]
    %v163 = vld [vmem:[%s2 + $0x20] sm:$0xff]
    %v164 = vld [vmem:[%s2 + $0x28] sm:$0xff]
    %v165 = vld [vmem:[%s2 + $0x30] sm:$0x3]
    %vm166 = vcmask 408576
    %v168 = vsel %vm166, %v157, 0
    %v171 = vsel %vm166, %v158, 0
    %vm173 = vcmask 1041408
    %v175 = vsel %vm173, %v165, 0
    %177 = vmatprep.subr.mxu0 0.0
    %178 = vmatpush1.msra.mxu0 %v159
    %179 = vmatprep.subr.mxu0 0.0
    %180 = vmatpush1.msra.mxu0 %v160
    %181 = vmatprep.subr.mxu0 0.0
    %182 = vmatpush1.msra.mxu0 %v161
    %183 = vmatprep.subr.mxu0 0.0
    %184 = vmatpush1.msra.mxu0 %v162
    %185 = vmatprep.subr.mxu0 0.0
    %186 = vmatpush1.msra.mxu0 %v163
    %187 = vmatprep.subr.mxu0 0.0
    %188 = vmatpush1.msra.mxu0 %v164
    %189 = vmatprep.subr.mxu0 0.0
    %190 = vmatpush1.msra.mxu0 %v175
    %191 = vmatprep.subr.mxu0 0.0
    %192 = vmatpush1.msra.mxu0 0.0
    %193 = vmatprep.subr.mxu0 0.0
    %194 = vmatpush1.msra.mxu0 0.0
    %195 = vmatprep.subr.mxu0 0.0
    %196 = vmatpush1.msra.mxu0 0.0
    %197 = vmatprep.subr.mxu0 0.0
    %198 = vmatpush1.msra.mxu0 0.0
    %199 = vmatprep.subr.mxu0 0.0
    %200 = vmatpush1.msra.mxu0 0.0
    %201 = vmatprep.subr.mxu0 0.0
    %202 = vmatpush1.msra.mxu0 0.0
    %203 = vmatprep.subr.mxu0 0.0
    %204 = vmatpush1.msra.mxu0 0.0
    %205 = vmatprep.subr.mxu0 0.0
    %206 = vmatpush1.msra.mxu0 0.0
    %207 = vmatprep.subr.mxu0 0.0
    %208 = vmatpush1.msra.mxu0 0.0
    %209 = vmatprep.subr.mxu0 0.0
    %210 = vmatpush1.msra.mxu0 0.0
    %211 = vmatprep.subr.mxu0 0.0
    %212 = vmatpush1.msra.mxu0 0.0
    %213 = vmatprep.subr.mxu0 0.0
    %214 = vmatpush1.msra.mxu0 0.0
    %215 = vmatprep.subr.mxu0 0.0
    %216 = vmatpush1.msra.mxu0 0.0
    %217 = vmatprep.subr.mxu0 0.0
    %218 = vmatpush1.msra.mxu0 0.0
    %219 = vmatprep.subr.mxu0 0.0
    %220 = vmatpush1.msra.mxu0 0.0
    %221 = vmatprep.subr.mxu0 0.0
    %222 = vmatpush1.msra.mxu0 0.0
    %223 = vmatprep.subr.mxu0 0.0
    %224 = vmatpush1.msra.mxu0 0.0
    %225 = vmatprep.subr.mxu0 0.0
    %226 = vmatpush1.msra.mxu0 0.0
    %227 = vmatprep.subr.mxu0 0.0
    %228 = vmatpush1.msra.mxu0 0.0
    %229 = vmatprep.subr.mxu0 0.0
    %230 = vmatpush1.msra.mxu0 0.0
    %231 = vmatprep.subr.mxu0 0.0
    %232 = vmatpush1.msra.mxu0 0.0
    %233 = vmatprep.subr.mxu0 0.0
    %234 = vmatpush1.msra.mxu0 0.0
    %235 = vmatprep.subr.mxu0 0.0
    %236 = vmatpush1.msra.mxu0 0.0
    %237 = vmatprep.subr.mxu0 0.0
    %238 = vmatpush1.msra.mxu0 0.0
    %239 = vmatprep.subr.mxu0 0.0
    %240 = vmatpush1.msra.mxu0 0.0
    %241 = vmatprep.mubr.f32.mxu0 0.0
    %242 = vmatmul.mubr.f32.gmra.mrb[0].mxu0 %v168
    %v243 = vpop.f32.mrb[0].mxu0
    %v244 = vadd.f32 0.0, %v243
    %v245 = vpop.f32.mrb[0].mxu0
    %246 = vmatprep.mubr.f32.mxu0 0.0
    %247 = vmatmul.mubr.f32.gmra.mrb[0].mxu0 %v171
    %v248 = vpop.f32.mrb[0].mxu0
    %v249 = vadd.f32 0.0, %v248
    %v250 = vpop.f32.mrb[0].mxu0
    %251 = vdwg.mxu0
    %v252 = vld [vmem:[#allocation2] sm:$0xff]
    %v253 = vld [vmem:[#allocation2 + $0x8] sm:$0xff]
    %vm254 = vcmask 261120
    %v256 = vsel %vm254, %v244, 0
    %v259 = vsel %vm254, %v249, 0
    %261 = vmatprep.subr.mxu0 0.0
    %262 = vmatpush1.xpose.msra.mxu0 %v256
    %263 = vmatprep.subr.mxu0 0.0
    %264 = vmatpush1.xpose.msra.mxu0 %v259
    %265 = vmatprep.subr.mxu0 0.0
    %266 = vmatpush1.xpose.msra.mxu0 0.0
    %267 = vmatprep.subr.mxu0 0.0
    %268 = vmatpush1.xpose.msra.mxu0 0.0
    %269 = vmatprep.subr.mxu0 0.0
    %270 = vmatpush1.xpose.msra.mxu0 0.0
    %271 = vmatprep.subr.mxu0 0.0
    %272 = vmatpush1.xpose.msra.mxu0 0.0
    %273 = vmatprep.subr.mxu0 0.0
    %274 = vmatpush1.xpose.msra.mxu0 0.0
    %275 = vmatprep.subr.mxu0 0.0
    %276 = vmatpush1.xpose.msra.mxu0 0.0
    %277 = vmatprep.subr.mxu0 0.0
    %278 = vmatpush1.xpose.msra.mxu0 0.0
    %279 = vmatprep.subr.mxu0 0.0
    %280 = vmatpush1.xpose.msra.mxu0 0.0
    %281 = vmatprep.subr.mxu0 0.0
    %282 = vmatpush1.xpose.msra.mxu0 0.0
    %283 = vmatprep.subr.mxu0 0.0
    %284 = vmatpush1.xpose.msra.mxu0 0.0
    %285 = vmatprep.subr.mxu0 0.0
    %286 = vmatpush1.xpose.msra.mxu0 0.0
    %287 = vmatprep.subr.mxu0 0.0
    %288 = vmatpush1.xpose.msra.mxu0 0.0
    %289 = vmatprep.subr.mxu0 0.0
    %290 = vmatpush1.xpose.msra.mxu0 0.0
    %291 = vmatprep.subr.mxu0 0.0
    %292 = vmatpush1.xpose.msra.mxu0 0.0
    %293 = vmatprep.subr.mxu0 0.0
    %294 = vmatpush1.xpose.msra.mxu0 0.0
    %295 = vmatprep.subr.mxu0 0.0
    %296 = vmatpush1.xpose.msra.mxu0 0.0
    %297 = vmatprep.subr.mxu0 0.0
    %298 = vmatpush1.xpose.msra.mxu0 0.0
    %299 = vmatprep.subr.mxu0 0.0
    %300 = vmatpush1.xpose.msra.mxu0 0.0
    %301 = vmatprep.subr.mxu0 0.0
    %302 = vmatpush1.xpose.msra.mxu0 0.0
    %303 = vmatprep.subr.mxu0 0.0
    %304 = vmatpush1.xpose.msra.mxu0 0.0
    %305 = vmatprep.subr.mxu0 0.0
    %306 = vmatpush1.xpose.msra.mxu0 0.0
    %307 = vmatprep.subr.mxu0 0.0
    %308 = vmatpush1.xpose.msra.mxu0 0.0
    %309 = vmatprep.subr.mxu0 0.0
    %310 = vmatpush1.xpose.msra.mxu0 0.0
    %311 = vmatprep.subr.mxu0 0.0
    %312 = vmatpush1.xpose.msra.mxu0 0.0
    %313 = vmatprep.subr.mxu0 0.0
    %314 = vmatpush1.xpose.msra.mxu0 0.0
    %315 = vmatprep.subr.mxu0 0.0
    %316 = vmatpush1.xpose.msra.mxu0 0.0
    %317 = vmatprep.subr.mxu0 0.0
    %318 = vmatpush1.xpose.msra.mxu0 0.0
    %319 = vmatprep.subr.mxu0 0.0
    %320 = vmatpush1.xpose.msra.mxu0 0.0
    %321 = vmatprep.subr.mxu0 0.0
    %322 = vmatpush1.xpose.msra.mxu0 0.0
    %323 = vmatprep.subr.mxu0 0.0
    %324 = vmatpush1.xpose.msra.mxu0 0.0
    %325 = vmatprep.mubr.f32.mxu0 0.0
    %326 = vmatmul.mubr.f32.gmra.mrb[0].mxu0 %v256
    %v327 = vpop.f32.mrb[0].mxu0
    %v328 = vadd.f32 0.0, %v327
    %v329 = vpop.f32.mrb[0].mxu0
    %330 = vmatprep.mubr.f32.mxu0 0.0
    %331 = vmatmul.mubr.f32.gmra.mrb[0].mxu0 %v259
    %v332 = vpop.f32.mrb[0].mxu0
    %v333 = vadd.f32 0.0, %v332
    %v334 = vpop.f32.mrb[0].mxu0
    %335 = vdwg.mxu0
    %v336 = vmul.f32 %v328, %v328
    %v337 = vmul.f32 %v333, %v333
    %vm338 = vcmask 130048
    %v339 = vsel %vm338, %v336, 0.0
    %340 = vadd.xlane.f32.xlu0 %v339
    %v341 = vpop.xlane.xlu0 %340
    %v342 = vsel %vm338, %v337, 0.0
    %343 = vadd.xlane.f32.xlu0 %v342
    %v344 = vpop.xlane.xlu0 %343
    %v345 = vadd.f32 %v341, 1e-12
    %v346 = vadd.f32 %v344, 1e-12
    %v347 = vrsqrt.pop %v345
    %v348 = vrsqrt.pop %v346
    %v349 = vmul.f32 %v328, %v347
    %v350 = vmul.f32 %v333, %v348
    %v351 = vadd.f32 %v252, %v349
    %v352 = vadd.f32 %v253, %v350
    %v354 = vsel %vm338, %v351, 0
    %v357 = vsel %vm338, %v352, 0
    %359 = vmatprep.subr.mxu0 0.0
    %360 = vmatpush1.msra.mxu0 %v244
    %361 = vmatprep.subr.mxu0 0.0
    %362 = vmatpush1.msra.mxu0 %v249
    %363 = vmatprep.subr.mxu0 0.0
    %364 = vmatpush1.msra.mxu0 0.0
    %365 = vmatprep.subr.mxu0 0.0
    %366 = vmatpush1.msra.mxu0 0.0
    %367 = vmatprep.subr.mxu0 0.0
    %368 = vmatpush1.msra.mxu0 0.0
    %369 = vmatprep.subr.mxu0 0.0
    %370 = vmatpush1.msra.mxu0 0.0
    %371 = vmatprep.subr.mxu0 0.0
    %372 = vmatpush1.msra.mxu0 0.0
    %373 = vmatprep.subr.mxu0 0.0
    %374 = vmatpush1.msra.mxu0 0.0
    %375 = vmatprep.subr.mxu0 0.0
    %376 = vmatpush1.msra.mxu0 0.0
    %377 = vmatprep.subr.mxu0 0.0
    %378 = vmatpush1.msra.mxu0 0.0
    %379 = vmatprep.subr.mxu0 0.0
    %380 = vmatpush1.msra.mxu0 0.0
    %381 = vmatprep.subr.mxu0 0.0
    %382 = vmatpush1.msra.mxu0 0.0
    %383 = vmatprep.subr.mxu0 0.0
    %384 = vmatpush1.msra.mxu0 0.0
    %385 = vmatprep.subr.mxu0 0.0
    %386 = vmatpush1.msra.mxu0 0.0
    %387 = vmatprep.subr.mxu0 0.0
    %388 = vmatpush1.msra.mxu0 0.0
    %389 = vmatprep.subr.mxu0 0.0
    %390 = vmatpush1.msra.mxu0 0.0
    %391 = vmatprep.subr.mxu0 0.0
    %392 = vmatpush1.msra.mxu0 0.0
    %393 = vmatprep.subr.mxu0 0.0
    %394 = vmatpush1.msra.mxu0 0.0
    %395 = vmatprep.subr.mxu0 0.0
    %396 = vmatpush1.msra.mxu0 0.0
    %397 = vmatprep.subr.mxu0 0.0
    %398 = vmatpush1.msra.mxu0 0.0
    %399 = vmatprep.subr.mxu0 0.0
    %400 = vmatpush1.msra.mxu0 0.0
    %401 = vmatprep.subr.mxu0 0.0
    %402 = vmatpush1.msra.mxu0 0.0
    %403 = vmatprep.subr.mxu0 0.0
    %404 = vmatpush1.msra.mxu0 0.0
    %405 = vmatprep.subr.mxu0 0.0
    %406 = vmatpush1.msra.mxu0 0.0
    %407 = vmatprep.subr.mxu0 0.0
    %408 = vmatpush1.msra.mxu0 0.0
    %409 = vmatprep.subr.mxu0 0.0
    %410 = vmatpush1.msra.mxu0 0.0
    %411 = vmatprep.subr.mxu0 0.0
    %412 = vmatpush1.msra.mxu0 0.0
    %413 = vmatprep.subr.mxu0 0.0
    %414 = vmatpush1.msra.mxu0 0.0
    %415 = vmatprep.subr.mxu0 0.0
    %416 = vmatpush1.msra.mxu0 0.0
    %417 = vmatprep.subr.mxu0 0.0
    %418 = vmatpush1.msra.mxu0 0.0
    %419 = vmatprep.subr.mxu0 0.0
    %420 = vmatpush1.msra.mxu0 0.0
    %421 = vmatprep.subr.mxu0 0.0
    %422 = vmatpush1.msra.mxu0 0.0
    %423 = vmatprep.mubr.f32.mxu0 0.0
    %424 = vmatmul.mubr.f32.gmra.mrb[0].mxu0 %v354
    %v425 = vpop.f32.mrb[0].mxu0
    %v426 = vadd.f32 0.0, %v425
    %v427 = vpop.f32.mrb[0].mxu0
    %428 = vmatprep.mubr.f32.mxu0 0.0
    %429 = vmatmul.mubr.f32.gmra.mrb[0].mxu0 %v357
    %v430 = vpop.f32.mrb[0].mxu0
    %v431 = vadd.f32 0.0, %v430
    %v432 = vpop.f32.mrb[0].mxu0
    %433 = vdwg.mxu0
    %v434 = vld [vmem:[#allocation8] sm:$0xff]
    %v435 = vld [vmem:[#allocation8 + $0x8] sm:$0xff]
    %v436 = vld [vmem:[#allocation8 + $0x10] sm:$0xff]
    %v437 = vld [vmem:[#allocation8 + $0x18] sm:$0xff]
    %v438 = vld [vmem:[#allocation10] sm:$0xff]
    %v439 = vld [vmem:[#allocation10 + $0x8] sm:$0xff]
    %v440 = vld [vmem:[#allocation10 + $0x10] sm:$0xff]
    %v441 = vld [vmem:[#allocation10 + $0x18] sm:$0xff]
    %v443 = vsel %vm254, %v426, 0
    %v446 = vsel %vm254, %v431, 0
    %448 = vmatprep.subr.mxu0 0.0
    %449 = vmatpush1.msra.mxu0 %v438
    %450 = vmatprep.subr.mxu0 0.0
    %451 = vmatpush1.msra.mxu0 %v439
    %452 = vmatprep.subr.mxu0 0.0
    %453 = vmatpush1.msra.mxu0 %v440
    %454 = vmatprep.subr.mxu0 0.0
    %455 = vmatpush1.msra.mxu0 %v441
    %456 = vmatprep.subr.mxu0 0.0
    %457 = vmatpush1.msra.mxu0 0.0
    %458 = vmatprep.subr.mxu0 0.0
    %459 = vmatpush1.msra.mxu0 0.0
    %460 = vmatprep.subr.mxu0 0.0
    %461 = vmatpush1.msra.mxu0 0.0
    %462 = vmatprep.subr.mxu0 0.0
    %463 = vmatpush1.msra.mxu0 0.0
    %464 = vmatprep.subr.mxu0 0.0
    %465 = vmatpush1.msra.mxu0 0.0
    %466 = vmatprep.subr.mxu0 0.0
    %467 = vmatpush1.msra.mxu0 0.0
    %468 = vmatprep.subr.mxu0 0.0
    %469 = vmatpush1.msra.mxu0 0.0
    %470 = vmatprep.subr.mxu0 0.0
    %471 = vmatpush1.msra.mxu0 0.0
    %472 = vmatprep.subr.mxu0 0.0
    %473 = vmatpush1.msra.mxu0 0.0
    %474 = vmatprep.subr.mxu0 0.0
    %475 = vmatpush1.msra.mxu0 0.0
    %476 = vmatprep.subr.mxu0 0.0
    %477 = vmatpush1.msra.mxu0 0.0
    %478 = vmatprep.subr.mxu0 0.0
    %479 = vmatpush1.msra.mxu0 0.0
    %480 = vmatprep.subr.mxu0 0.0
    %481 = vmatpush1.msra.mxu0 0.0
    %482 = vmatprep.subr.mxu0 0.0
    %483 = vmatpush1.msra.mxu0 0.0
    %484 = vmatprep.subr.mxu0 0.0
    %485 = vmatpush1.msra.mxu0 0.0
    %486 = vmatprep.subr.mxu0 0.0
    %487 = vmatpush1.msra.mxu0 0.0
    %488 = vmatprep.subr.mxu0 0.0
    %489 = vmatpush1.msra.mxu0 0.0
    %490 = vmatprep.subr.mxu0 0.0
    %491 = vmatpush1.msra.mxu0 0.0
    %492 = vmatprep.subr.mxu0 0.0
    %493 = vmatpush1.msra.mxu0 0.0
    %494 = vmatprep.subr.mxu0 0.0
    %495 = vmatpush1.msra.mxu0 0.0
    %496 = vmatprep.subr.mxu0 0.0
    %497 = vmatpush1.msra.mxu0 0.0
    %498 = vmatprep.subr.mxu0 0.0
    %499 = vmatpush1.msra.mxu0 0.0
    %500 = vmatprep.subr.mxu0 0.0
    %501 = vmatpush1.msra.mxu0 0.0
    %502 = vmatprep.subr.mxu0 0.0
    %503 = vmatpush1.msra.mxu0 0.0
    %504 = vmatprep.subr.mxu0 0.0
    %505 = vmatpush1.msra.mxu0 0.0
    %506 = vmatprep.subr.mxu0 0.0
    %507 = vmatpush1.msra.mxu0 0.0
    %508 = vmatprep.subr.mxu0 0.0
    %509 = vmatpush1.msra.mxu0 0.0
    %510 = vmatprep.subr.mxu0 0.0
    %511 = vmatpush1.msra.mxu0 0.0
    %512 = vmatprep.mubr.f32.mxu0 0.0
    %513 = vmatmul.mubr.f32.gmra.mrb[0].mxu0 %v443
    %v514 = vpop.f32.mrb[0].mxu0
    %v515 = vadd.f32 0.0, %v514
    %v516 = vpop.f32.mrb[0].mxu0
    %517 = vmatprep.mubr.f32.mxu0 0.0
    %518 = vmatmul.mubr.f32.gmra.mrb[0].mxu0 %v446
    %v519 = vpop.f32.mrb[0].mxu0
    %v520 = vadd.f32 0.0, %v519
    %v521 = vpop.f32.mrb[0].mxu0
    %522 = vdwg.mxu0
    %v523 = vld [vmem:[#allocation5] sm:$0xff]
    %v524 = vld [vmem:[#allocation5 + $0x8] sm:$0xff]
    %v525 = vld [vmem:[#allocation5 + $0x10] sm:$0xff]
    %v526 = vld [vmem:[#allocation5 + $0x18] sm:$0xff]
    %527 = vmatprep.subr.mxu0 0.0
    %528 = vmatpush1.msra.mxu0 %v523
    %529 = vmatprep.subr.mxu0 0.0
    %530 = vmatpush1.msra.mxu0 %v524
    %531 = vmatprep.subr.mxu0 0.0
    %532 = vmatpush1.msra.mxu0 %v525
    %533 = vmatprep.subr.mxu0 0.0
    %534 = vmatpush1.msra.mxu0 %v526
    %535 = vmatprep.subr.mxu0 0.0
    %536 = vmatpush1.msra.mxu0 0.0
    %537 = vmatprep.subr.mxu0 0.0
    %538 = vmatpush1.msra.mxu0 0.0
    %539 = vmatprep.subr.mxu0 0.0
    %540 = vmatpush1.msra.mxu0 0.0
    %541 = vmatprep.subr.mxu0 0.0
    %542 = vmatpush1.msra.mxu0 0.0
    %543 = vmatprep.subr.mxu0 0.0
    %544 = vmatpush1.msra.mxu0 0.0
    %545 = vmatprep.subr.mxu0 0.0
    %546 = vmatpush1.msra.mxu0 0.0
    %547 = vmatprep.subr.mxu0 0.0
    %548 = vmatpush1.msra.mxu0 0.0
    %549 = vmatprep.subr.mxu0 0.0
    %550 = vmatpush1.msra.mxu0 0.0
    %551 = vmatprep.subr.mxu0 0.0
    %552 = vmatpush1.msra.mxu0 0.0
    %553 = vmatprep.subr.mxu0 0.0
    %554 = vmatpush1.msra.mxu0 0.0
    %555 = vmatprep.subr.mxu0 0.0
    %556 = vmatpush1.msra.mxu0 0.0
    %557 = vmatprep.subr.mxu0 0.0
    %558 = vmatpush1.msra.mxu0 0.0
    %559 = vmatprep.subr.mxu0 0.0
    %560 = vmatpush1.msra.mxu0 0.0
    %561 = vmatprep.subr.mxu0 0.0
    %562 = vmatpush1.msra.mxu0 0.0
    %563 = vmatprep.subr.mxu0 0.0
    %564 = vmatpush1.msra.mxu0 0.0
    %565 = vmatprep.subr.mxu0 0.0
    %566 = vmatpush1.msra.mxu0 0.0
    %567 = vmatprep.subr.mxu0 0.0
    %568 = vmatpush1.msra.mxu0 0.0
    %569 = vmatprep.subr.mxu0 0.0
    %570 = vmatpush1.msra.mxu0 0.0
    %571 = vmatprep.subr.mxu0 0.0
    %572 = vmatpush1.msra.mxu0 0.0
    %573 = vmatprep.subr.mxu0 0.0
    %574 = vmatpush1.msra.mxu0 0.0
    %575 = vmatprep.subr.mxu0 0.0
    %576 = vmatpush1.msra.mxu0 0.0
    %577 = vmatprep.subr.mxu0 0.0
    %578 = vmatpush1.msra.mxu0 0.0
    %579 = vmatprep.subr.mxu0 0.0
    %580 = vmatpush1.msra.mxu0 0.0
    %581 = vmatprep.subr.mxu0 0.0
    %582 = vmatpush1.msra.mxu0 0.0
    %583 = vmatprep.subr.mxu0 0.0
    %584 = vmatpush1.msra.mxu0 0.0
    %585 = vmatprep.subr.mxu0 0.0
    %586 = vmatpush1.msra.mxu0 0.0
    %587 = vmatprep.subr.mxu0 0.0
    %588 = vmatpush1.msra.mxu0 0.0
    %589 = vmatprep.subr.mxu0 0.0
    %590 = vmatpush1.msra.mxu0 0.0
    %591 = vmatprep.mubr.f32.mxu0 0.0
    %592 = vmatmul.mubr.f32.gmra.mrb[0].mxu0 %v256
    %v593 = vpop.f32.mrb[0].mxu0
    %v594 = vadd.f32 0.0, %v593
    %v595 = vpop.f32.mrb[0].mxu0
    %596 = vmatprep.mubr.f32.mxu0 0.0
    %597 = vmatmul.mubr.f32.gmra.mrb[0].mxu0 %v259
    %v598 = vpop.f32.mrb[0].mxu0
    %v599 = vadd.f32 0.0, %v598
    %v600 = vpop.f32.mrb[0].mxu0
    %601 = vdwg.mxu0
    %v602 = vld [vmem:[#allocation7] sm:$0xff]
    %v603 = vld [vmem:[#allocation7 + $0x8] sm:$0xff]
    %v604 = vld [vmem:[#allocation7 + $0x10] sm:$0xff]
    %v605 = vld [vmem:[#allocation7 + $0x18] sm:$0xff]
    %606 = vmatprep.subr.mxu0 0.0
    %607 = vmatpush1.msra.mxu0 %v434
    %608 = vmatprep.subr.mxu0 0.0
    %609 = vmatpush1.msra.mxu0 %v435
    %610 = vmatprep.subr.mxu0 0.0
    %611 = vmatpush1.msra.mxu0 %v436
    %612 = vmatprep.subr.mxu0 0.0
    %613 = vmatpush1.msra.mxu0 %v437
    %614 = vmatprep.subr.mxu0 0.0
    %615 = vmatpush1.msra.mxu0 0.0
    %616 = vmatprep.subr.mxu0 0.0
    %617 = vmatpush1.msra.mxu0 0.0
    %618 = vmatprep.subr.mxu0 0.0
    %619 = vmatpush1.msra.mxu0 0.0
    %620 = vmatprep.subr.mxu0 0.0
    %621 = vmatpush1.msra.mxu0 0.0
    %622 = vmatprep.subr.mxu0 0.0
    %623 = vmatpush1.msra.mxu0 0.0
    %624 = vmatprep.subr.mxu0 0.0
    %625 = vmatpush1.msra.mxu0 0.0
    %626 = vmatprep.subr.mxu0 0.0
    %627 = vmatpush1.msra.mxu0 0.0
    %628 = vmatprep.subr.mxu0 0.0
    %629 = vmatpush1.msra.mxu0 0.0
    %630 = vmatprep.subr.mxu0 0.0
    %631 = vmatpush1.msra.mxu0 0.0
    %632 = vmatprep.subr.mxu0 0.0
    %633 = vmatpush1.msra.mxu0 0.0
    %634 = vmatprep.subr.mxu0 0.0
    %635 = vmatpush1.msra.mxu0 0.0
    %636 = vmatprep.subr.mxu0 0.0
    %637 = vmatpush1.msra.mxu0 0.0
    %638 = vmatprep.subr.mxu0 0.0
    %639 = vmatpush1.msra.mxu0 0.0
    %640 = vmatprep.subr.mxu0 0.0
    %641 = vmatpush1.msra.mxu0 0.0
    %642 = vmatprep.subr.mxu0 0.0
    %643 = vmatpush1.msra.mxu0 0.0
    %644 = vmatprep.subr.mxu0 0.0
    %645 = vmatpush1.msra.mxu0 0.0
    %646 = vmatprep.subr.mxu0 0.0
    %647 = vmatpush1.msra.mxu0 0.0
    %648 = vmatprep.subr.mxu0 0.0
    %649 = vmatpush1.msra.mxu0 0.0
    %650 = vmatprep.subr.mxu0 0.0
    %651 = vmatpush1.msra.mxu0 0.0
    %652 = vmatprep.subr.mxu0 0.0
    %653 = vmatpush1.msra.mxu0 0.0
    %654 = vmatprep.subr.mxu0 0.0
    %655 = vmatpush1.msra.mxu0 0.0
    %656 = vmatprep.subr.mxu0 0.0
    %657 = vmatpush1.msra.mxu0 0.0
    %658 = vmatprep.subr.mxu0 0.0
    %659 = vmatpush1.msra.mxu0 0.0
    %660 = vmatprep.subr.mxu0 0.0
    %661 = vmatpush1.msra.mxu0 0.0
    %662 = vmatprep.subr.mxu0 0.0
    %663 = vmatpush1.msra.mxu0 0.0
    %664 = vmatprep.subr.mxu0 0.0
    %665 = vmatpush1.msra.mxu0 0.0
    %666 = vmatprep.subr.mxu0 0.0
    %667 = vmatpush1.msra.mxu0 0.0
    %668 = vmatprep.subr.mxu0 0.0
    %669 = vmatpush1.msra.mxu0 0.0
    %670 = vmatprep.mubr.f32.mxu0 0.0
    %671 = vmatmul.mubr.f32.gmra.mrb[0].mxu0 %v443
    %v672 = vpop.f32.mrb[0].mxu0
    %v673 = vadd.f32 %v594, %v672
    %v674 = vpop.f32.mrb[0].mxu0
    %675 = vmatprep.mubr.f32.mxu0 0.0
    %676 = vmatmul.mubr.f32.gmra.mrb[0].mxu0 %v446
    %v677 = vpop.f32.mrb[0].mxu0
    %v678 = vadd.f32 %v599, %v677
    %v679 = vpop.f32.mrb[0].mxu0
    %680 = vdwg.mxu0
    %v681 = vmax.f32 %v673, 0.0
    %v682 = vmax.f32 %v678, 0.0
    %v683 = vmul.f32 %v681, %v515
    %v684 = vmul.f32 %v682, %v520
    %685 = vmatprep.subr.mxu0 0.0
    %686 = vmatpush1.msra.mxu0 %v602
    %687 = vmatprep.subr.mxu0 0.0
    %688 = vmatpush1.msra.mxu0 %v603
    %689 = vmatprep.subr.mxu0 0.0
    %690 = vmatpush1.msra.mxu0 %v604
    %691 = vmatprep.subr.mxu0 0.0
    %692 = vmatpush1.msra.mxu0 %v605
    %693 = vmatprep.subr.mxu0 0.0
    %694 = vmatpush1.msra.mxu0 0.0
    %695 = vmatprep.subr.mxu0 0.0
    %696 = vmatpush1.msra.mxu0 0.0
    %697 = vmatprep.subr.mxu0 0.0
    %698 = vmatpush1.msra.mxu0 0.0
    %699 = vmatprep.subr.mxu0 0.0
    %700 = vmatpush1.msra.mxu0 0.0
    %701 = vmatprep.subr.mxu0 0.0
    %702 = vmatpush1.msra.mxu0 0.0
    %703 = vmatprep.subr.mxu0 0.0
    %704 = vmatpush1.msra.mxu0 0.0
    %705 = vmatprep.subr.mxu0 0.0
    %706 = vmatpush1.msra.mxu0 0.0
    %707 = vmatprep.subr.mxu0 0.0
    %708 = vmatpush1.msra.mxu0 0.0
    %709 = vmatprep.subr.mxu0 0.0
    %710 = vmatpush1.msra.mxu0 0.0
    %711 = vmatprep.subr.mxu0 0.0
    %712 = vmatpush1.msra.mxu0 0.0
    %713 = vmatprep.subr.mxu0 0.0
    %714 = vmatpush1.msra.mxu0 0.0
    %715 = vmatprep.subr.mxu0 0.0
    %716 = vmatpush1.msra.mxu0 0.0
    %717 = vmatprep.subr.mxu0 0.0
    %718 = vmatpush1.msra.mxu0 0.0
    %719 = vmatprep.subr.mxu0 0.0
    %720 = vmatpush1.msra.mxu0 0.0
    %721 = vmatprep.subr.mxu0 0.0
    %722 = vmatpush1.msra.mxu0 0.0
    %723 = vmatprep.subr.mxu0 0.0
    %724 = vmatpush1.msra.mxu0 0.0
    %725 = vmatprep.subr.mxu0 0.0
    %726 = vmatpush1.msra.mxu0 0.0
    %727 = vmatprep.subr.mxu0 0.0
    %728 = vmatpush1.msra.mxu0 0.0
    %729 = vmatprep.subr.mxu0 0.0
    %730 = vmatpush1.msra.mxu0 0.0
    %731 = vmatprep.subr.mxu0 0.0
    %732 = vmatpush1.msra.mxu0 0.0
    %733 = vmatprep.subr.mxu0 0.0
    %734 = vmatpush1.msra.mxu0 0.0
    %735 = vmatprep.subr.mxu0 0.0
    %736 = vmatpush1.msra.mxu0 0.0
    %737 = vmatprep.subr.mxu0 0.0
    %738 = vmatpush1.msra.mxu0 0.0
    %739 = vmatprep.subr.mxu0 0.0
    %740 = vmatpush1.msra.mxu0 0.0
    %741 = vmatprep.subr.mxu0 0.0
    %742 = vmatpush1.msra.mxu0 0.0
    %743 = vmatprep.subr.mxu0 0.0
    %744 = vmatpush1.msra.mxu0 0.0
    %745 = vmatprep.subr.mxu0 0.0
    %746 = vmatpush1.msra.mxu0 0.0
    %747 = vmatprep.subr.mxu0 0.0
    %748 = vmatpush1.msra.mxu0 0.0
    %749 = vmatprep.mubr.f32.mxu0 0.0
    %750 = vmatmul.mubr.f32.gmra.mrb[0].mxu0 %v256
    %v751 = vpop.f32.mrb[0].mxu0
    %v752 = vadd.f32 %v683, %v751
    %v753 = vpop.f32.mrb[0].mxu0
    %754 = vmatprep.mubr.f32.mxu0 0.0
    %755 = vmatmul.mubr.f32.gmra.mrb[0].mxu0 %v259
    %v756 = vpop.f32.mrb[0].mxu0
    %v757 = vadd.f32 %v684, %v756
    %v758 = vpop.f32.mrb[0].mxu0
    %759 = vdwg.mxu0
    %v760 = vld [vmem:[%s8] sm:$0xff]
    %v761 = vld [vmem:[%s8 + $0x8] sm:$0xff]
    %v762 = vld [vmem:[%s8 + $0x10] sm:$0xff]
    %v763 = vld [vmem:[%s8 + $0x18] sm:$0xff]
    %764 = vmatprep.subr.mxu0 0.0
    %765 = vmatpush1.msra.mxu0 %v760
    %766 = vmatprep.subr.mxu0 0.0
    %767 = vmatpush1.msra.mxu0 %v761
    %768 = vmatprep.subr.mxu0 0.0
    %769 = vmatpush1.msra.mxu0 %v762
    %770 = vmatprep.subr.mxu0 0.0
    %771 = vmatpush1.msra.mxu0 %v763
    %772 = vmatprep.subr.mxu0 0.0
    %773 = vmatpush1.msra.mxu0 0.0
    %774 = vmatprep.subr.mxu0 0.0
    %775 = vmatpush1.msra.mxu0 0.0
    %776 = vmatprep.subr.mxu0 0.0
    %777 = vmatpush1.msra.mxu0 0.0
    %778 = vmatprep.subr.mxu0 0.0
    %779 = vmatpush1.msra.mxu0 0.0
    %780 = vmatprep.subr.mxu0 0.0
    %781 = vmatpush1.msra.mxu0 0.0
    %782 = vmatprep.subr.mxu0 0.0
    %783 = vmatpush1.msra.mxu0 0.0
    %784 = vmatprep.subr.mxu0 0.0
    %785 = vmatpush1.msra.mxu0 0.0
    %786 = vmatprep.subr.mxu0 0.0
    %787 = vmatpush1.msra.mxu0 0.0
    %788 = vmatprep.subr.mxu0 0.0
    %789 = vmatpush1.msra.mxu0 0.0
    %790 = vmatprep.subr.mxu0 0.0
    %791 = vmatpush1.msra.mxu0 0.0
    %792 = vmatprep.subr.mxu0 0.0
    %793 = vmatpush1.msra.mxu0 0.0
    %794 = vmatprep.subr.mxu0 0.0
    %795 = vmatpush1.msra.mxu0 0.0
    %796 = vmatprep.subr.mxu0 0.0
    %797 = vmatpush1.msra.mxu0 0.0
    %798 = vmatprep.subr.mxu0 0.0
    %799 = vmatpush1.msra.mxu0 0.0
    %800 = vmatprep.subr.mxu0 0.0
    %801 = vmatpush1.msra.mxu0 0.0
    %802 = vmatprep.subr.mxu0 0.0
    %803 = vmatpush1.msra.mxu0 0.0
    %804 = vmatprep.subr.mxu0 0.0
    %805 = vmatpush1.msra.mxu0 0.0
    %806 = vmatprep.subr.mxu0 0.0
    %807 = vmatpush1.msra.mxu0 0.0
    %808 = vmatprep.subr.mxu0 0.0
    %809 = vmatpush1.msra.mxu0 0.0
    %810 = vmatprep.subr.mxu0 0.0
    %811 = vmatpush1.msra.mxu0 0.0
    %812 = vmatprep.subr.mxu0 0.0
    %813 = vmatpush1.msra.mxu0 0.0
    %814 = vmatprep.subr.mxu0 0.0
    %815 = vmatpush1.msra.mxu0 0.0
    %816 = vmatprep.subr.mxu0 0.0
    %817 = vmatpush1.msra.mxu0 0.0
    %818 = vmatprep.subr.mxu0 0.0
    %819 = vmatpush1.msra.mxu0 0.0
    %820 = vmatprep.subr.mxu0 0.0
    %821 = vmatpush1.msra.mxu0 0.0
    %822 = vmatprep.subr.mxu0 0.0
    %823 = vmatpush1.msra.mxu0 0.0
    %824 = vmatprep.subr.mxu0 0.0
    %825 = vmatpush1.msra.mxu0 0.0
    %826 = vmatprep.subr.mxu0 0.0
    %827 = vmatpush1.msra.mxu0 0.0
    %828 = vmatprep.mubr.f32.mxu0 0.0
    %829 = vmatmul.mubr.f32.gmra.mrb[0].mxu0 %v256
    %v830 = vpop.f32.mrb[0].mxu0
    %v831 = vadd.f32 0.0, %v830
    %v832 = vpop.f32.mrb[0].mxu0
    %833 = vmatprep.mubr.f32.mxu0 0.0
    %834 = vmatmul.mubr.f32.gmra.mrb[0].mxu0 %v259
    %v835 = vpop.f32.mrb[0].mxu0
    %v836 = vadd.f32 0.0, %v835
    %v837 = vpop.f32.mrb[0].mxu0
    %838 = vdwg.mxu0
    %v840 = vsel %vm254, %v831, 0
    %v843 = vsel %vm254, %v836, 0
    %845 = vmatprep.subr.mxu0 0.0
    %846 = vmatpush1.xpose.msra.mxu0 %v256
    %847 = vmatprep.subr.mxu0 0.0
    %848 = vmatpush1.xpose.msra.mxu0 %v259
    %849 = vmatprep.subr.mxu0 0.0
    %850 = vmatpush1.xpose.msra.mxu0 0.0
    %851 = vmatprep.subr.mxu0 0.0
    %852 = vmatpush1.xpose.msra.mxu0 0.0
    %853 = vmatprep.subr.mxu0 0.0
    %854 = vmatpush1.xpose.msra.mxu0 0.0
    %855 = vmatprep.subr.mxu0 0.0
    %856 = vmatpush1.xpose.msra.mxu0 0.0
    %857 = vmatprep.subr.mxu0 0.0
    %858 = vmatpush1.xpose.msra.mxu0 0.0
    %859 = vmatprep.subr.mxu0 0.0
    %860 = vmatpush1.xpose.msra.mxu0 0.0
    %861 = vmatprep.subr.mxu0 0.0
    %862 = vmatpush1.xpose.msra.mxu0 0.0
    %863 = vmatprep.subr.mxu0 0.0
    %864 = vmatpush1.xpose.msra.mxu0 0.0
    %865 = vmatprep.subr.mxu0 0.0
    %866 = vmatpush1.xpose.msra.mxu0 0.0
    %867 = vmatprep.subr.mxu0 0.0
    %868 = vmatpush1.xpose.msra.mxu0 0.0
    %869 = vmatprep.subr.mxu0 0.0
    %870 = vmatpush1.xpose.msra.mxu0 0.0
    %871 = vmatprep.subr.mxu0 0.0
    %872 = vmatpush1.xpose.msra.mxu0 0.0
    %873 = vmatprep.subr.mxu0 0.0
    %874 = vmatpush1.xpose.msra.mxu0 0.0
    %875 = vmatprep.subr.mxu0 0.0
    %876 = vmatpush1.xpose.msra.mxu0 0.0
    %877 = vmatprep.subr.mxu0 0.0
    %878 = vmatpush1.xpose.msra.mxu0 0.0
    %879 = vmatprep.subr.mxu0 0.0
    %880 = vmatpush1.xpose.msra.mxu0 0.0
    %881 = vmatprep.subr.mxu0 0.0
    %882 = vmatpush1.xpose.msra.mxu0 0.0
    %883 = vmatprep.subr.mxu0 0.0
    %884 = vmatpush1.xpose.msra.mxu0 0.0
    %885 = vmatprep.subr.mxu0 0.0
    %886 = vmatpush1.xpose.msra.mxu0 0.0
    %887 = vmatprep.subr.mxu0 0.0
    %888 = vmatpush1.xpose.msra.mxu0 0.0
    %889 = vmatprep.subr.mxu0 0.0
    %890 = vmatpush1.xpose.msra.mxu0 0.0
    %891 = vmatprep.subr.mxu0 0.0
    %892 = vmatpush1.xpose.msra.mxu0 0.0
    %893 = vmatprep.subr.mxu0 0.0
    %894 = vmatpush1.xpose.msra.mxu0 0.0
    %895 = vmatprep.subr.mxu0 0.0
    %896 = vmatpush1.xpose.msra.mxu0 0.0
    %897 = vmatprep.subr.mxu0 0.0
    %898 = vmatpush1.xpose.msra.mxu0 0.0
    %899 = vmatprep.subr.mxu0 0.0
    %900 = vmatpush1.xpose.msra.mxu0 0.0
    %901 = vmatprep.subr.mxu0 0.0
    %902 = vmatpush1.xpose.msra.mxu0 0.0
    %903 = vmatprep.subr.mxu0 0.0
    %904 = vmatpush1.xpose.msra.mxu0 0.0
    %905 = vmatprep.subr.mxu0 0.0
    %906 = vmatpush1.xpose.msra.mxu0 0.0
    %907 = vmatprep.subr.mxu0 0.0
    %908 = vmatpush1.xpose.msra.mxu0 0.0
    %909 = vmatprep.mubr.f32.mxu0 0.0
    %910 = vmatmul.mubr.f32.gmra.mrb[0].mxu0 %v840
    %v911 = vpop.f32.mrb[0].mxu0
    %v912 = vadd.f32 0.0, %v911
    %v913 = vpop.f32.mrb[0].mxu0
    %914 = vmatprep.mubr.f32.mxu0 0.0
    %915 = vmatmul.mubr.f32.gmra.mrb[0].mxu0 %v843
    %v916 = vpop.f32.mrb[0].mxu0
    %v917 = vadd.f32 0.0, %v916
    %v918 = vpop.f32.mrb[0].mxu0
    %919 = vdwg.mxu0
    %v920 = vtanh.pop %v912
    %v921 = vtanh.pop %v917
    %v922 = vld [vmem:[#allocation11] sm:$0xff]
    %v923 = vld [vmem:[#allocation11 + $0x8] sm:$0xff]
    %v924 = vld [vmem:[#allocation11 + $0x10] sm:$0xff]
    %v925 = vld [vmem:[#allocation11 + $0x18] sm:$0xff]
    %926 = vmatprep.subr.mxu0 0.0
    %927 = vmatpush1.msra.mxu0 %v922
    %928 = vmatprep.subr.mxu0 0.0
    %929 = vmatpush1.msra.mxu0 %v923
    %930 = vmatprep.subr.mxu0 0.0
    %931 = vmatpush1.msra.mxu0 %v924
    %932 = vmatprep.subr.mxu0 0.0
    %933 = vmatpush1.msra.mxu0 %v925
    %934 = vmatprep.subr.mxu0 0.0
    %935 = vmatpush1.msra.mxu0 0.0
    %936 = vmatprep.subr.mxu0 0.0
    %937 = vmatpush1.msra.mxu0 0.0
    %938 = vmatprep.subr.mxu0 0.0
    %939 = vmatpush1.msra.mxu0 0.0
    %940 = vmatprep.subr.mxu0 0.0
    %941 = vmatpush1.msra.mxu0 0.0
    %942 = vmatprep.subr.mxu0 0.0
    %943 = vmatpush1.msra.mxu0 0.0
    %944 = vmatprep.subr.mxu0 0.0
    %945 = vmatpush1.msra.mxu0 0.0
    %946 = vmatprep.subr.mxu0 0.0
    %947 = vmatpush1.msra.mxu0 0.0
    %948 = vmatprep.subr.mxu0 0.0
    %949 = vmatpush1.msra.mxu0 0.0
    %950 = vmatprep.subr.mxu0 0.0
    %951 = vmatpush1.msra.mxu0 0.0
    %952 = vmatprep.subr.mxu0 0.0
    %953 = vmatpush1.msra.mxu0 0.0
    %954 = vmatprep.subr.mxu0 0.0
    %955 = vmatpush1.msra.mxu0 0.0
    %956 = vmatprep.subr.mxu0 0.0
    %957 = vmatpush1.msra.mxu0 0.0
    %958 = vmatprep.subr.mxu0 0.0
    %959 = vmatpush1.msra.mxu0 0.0
    %960 = vmatprep.subr.mxu0 0.0
    %961 = vmatpush1.msra.mxu0 0.0
    %962 = vmatprep.subr.mxu0 0.0
    %963 = vmatpush1.msra.mxu0 0.0
    %964 = vmatprep.subr.mxu0 0.0
    %965 = vmatpush1.msra.mxu0 0.0
    %966 = vmatprep.subr.mxu0 0.0
    %967 = vmatpush1.msra.mxu0 0.0
    %968 = vmatprep.subr.mxu0 0.0
    %969 = vmatpush1.msra.mxu0 0.0
    %970 = vmatprep.subr.mxu0 0.0
    %971 = vmatpush1.msra.mxu0 0.0
    %972 = vmatprep.subr.mxu0 0.0
    %973 = vmatpush1.msra.mxu0 0.0
    %974 = vmatprep.subr.mxu0 0.0
    %975 = vmatpush1.msra.mxu0 0.0
    %976 = vmatprep.subr.mxu0 0.0
    %977 = vmatpush1.msra.mxu0 0.0
    %978 = vmatprep.subr.mxu0 0.0
    %979 = vmatpush1.msra.mxu0 0.0
    %980 = vmatprep.subr.mxu0 0.0
    %981 = vmatpush1.msra.mxu0 0.0
    %982 = vmatprep.subr.mxu0 0.0
    %983 = vmatpush1.msra.mxu0 0.0
    %984 = vmatprep.subr.mxu0 0.0
    %985 = vmatpush1.msra.mxu0 0.0
    %986 = vmatprep.subr.mxu0 0.0
    %987 = vmatpush1.msra.mxu0 0.0
    %988 = vmatprep.subr.mxu0 0.0
    %989 = vmatpush1.msra.mxu0 0.0
    %990 = vmatprep.mubr.f32.mxu0 0.0
    %991 = vmatmul.mubr.f32.gmra.mrb[0].mxu0 %v256
    %v992 = vpop.f32.mrb[0].mxu0
    %v993 = vadd.f32 0.0, %v992
    %v994 = vpop.f32.mrb[0].mxu0
    %995 = vmatprep.mubr.f32.mxu0 0.0
    %996 = vmatmul.mubr.f32.gmra.mrb[0].mxu0 %v259
    %v997 = vpop.f32.mrb[0].mxu0
    %v998 = vadd.f32 0.0, %v997
    %v999 = vpop.f32.mrb[0].mxu0
    %1000 = vdwg.mxu0
    %s1001 = scalar_lea.vmem %s8, 32
    %v1002 = vld [vmem:[%s1001] sm:$0xff]
    %v1003 = vld [vmem:[%s1001 + $0x8] sm:$0xff]
    %v1004 = vld [vmem:[%s1001 + $0x10] sm:$0xff]
    %v1005 = vld [vmem:[%s1001 + $0x18] sm:$0xff]
    %1006 = vmatprep.subr.mxu0 0.0
    %1007 = vmatpush1.msra.mxu0 %v1002
    %1008 = vmatprep.subr.mxu0 0.0
    %1009 = vmatpush1.msra.mxu0 %v1003
    %1010 = vmatprep.subr.mxu0 0.0
    %1011 = vmatpush1.msra.mxu0 %v1004
    %1012 = vmatprep.subr.mxu0 0.0
    %1013 = vmatpush1.msra.mxu0 %v1005
    %1014 = vmatprep.subr.mxu0 0.0
    %1015 = vmatpush1.msra.mxu0 0.0
    %1016 = vmatprep.subr.mxu0 0.0
    %1017 = vmatpush1.msra.mxu0 0.0
    %1018 = vmatprep.subr.mxu0 0.0
    %1019 = vmatpush1.msra.mxu0 0.0
    %1020 = vmatprep.subr.mxu0 0.0
    %1021 = vmatpush1.msra.mxu0 0.0
    %1022 = vmatprep.subr.mxu0 0.0
    %1023 = vmatpush1.msra.mxu0 0.0
    %1024 = vmatprep.subr.mxu0 0.0
    %1025 = vmatpush1.msra.mxu0 0.0
    %1026 = vmatprep.subr.mxu0 0.0
    %1027 = vmatpush1.msra.mxu0 0.0
    %1028 = vmatprep.subr.mxu0 0.0
    %1029 = vmatpush1.msra.mxu0 0.0
    %1030 = vmatprep.subr.mxu0 0.0
    %1031 = vmatpush1.msra.mxu0 0.0
    %1032 = vmatprep.subr.mxu0 0.0
    %1033 = vmatpush1.msra.mxu0 0.0
    %1034 = vmatprep.subr.mxu0 0.0
    %1035 = vmatpush1.msra.mxu0 0.0
    %1036 = vmatprep.subr.mxu0 0.0
    %1037 = vmatpush1.msra.mxu0 0.0
    %1038 = vmatprep.subr.mxu0 0.0
    %1039 = vmatpush1.msra.mxu0 0.0
    %1040 = vmatprep.subr.mxu0 0.0
    %1041 = vmatpush1.msra.mxu0 0.0
    %1042 = vmatprep.subr.mxu0 0.0
    %1043 = vmatpush1.msra.mxu0 0.0
    %1044 = vmatprep.subr.mxu0 0.0
    %1045 = vmatpush1.msra.mxu0 0.0
    %1046 = vmatprep.subr.mxu0 0.0
    %1047 = vmatpush1.msra.mxu0 0.0
    %1048 = vmatprep.subr.mxu0 0.0
    %1049 = vmatpush1.msra.mxu0 0.0
    %1050 = vmatprep.subr.mxu0 0.0
    %1051 = vmatpush1.msra.mxu0 0.0
    %1052 = vmatprep.subr.mxu0 0.0
    %1053 = vmatpush1.msra.mxu0 0.0
    %1054 = vmatprep.subr.mxu0 0.0
    %1055 = vmatpush1.msra.mxu0 0.0
    %1056 = vmatprep.subr.mxu0 0.0
    %1057 = vmatpush1.msra.mxu0 0.0
    %1058 = vmatprep.subr.mxu0 0.0
    %1059 = vmatpush1.msra.mxu0 0.0
    %1060 = vmatprep.subr.mxu0 0.0
    %1061 = vmatpush1.msra.mxu0 0.0
    %1062 = vmatprep.subr.mxu0 0.0
    %1063 = vmatpush1.msra.mxu0 0.0
    %1064 = vmatprep.subr.mxu0 0.0
    %1065 = vmatpush1.msra.mxu0 0.0
    %1066 = vmatprep.subr.mxu0 0.0
    %1067 = vmatpush1.msra.mxu0 0.0
    %1068 = vmatprep.subr.mxu0 0.0
    %1069 = vmatpush1.msra.mxu0 0.0
    %1070 = vmatprep.mubr.f32.mxu0 0.0
    %1071 = vmatmul.mubr.f32.gmra.mrb[0].mxu0 %v256
    %v1072 = vpop.f32.mrb[0].mxu0
    %v1073 = vadd.f32 0.0, %v1072
    %v1074 = vpop.f32.mrb[0].mxu0
    %1075 = vmatprep.mubr.f32.mxu0 0.0
    %1076 = vmatmul.mubr.f32.gmra.mrb[0].mxu0 %v259
    %v1077 = vpop.f32.mrb[0].mxu0
    %v1078 = vadd.f32 0.0, %v1077
    %v1079 = vpop.f32.mrb[0].mxu0
    %1080 = vdwg.mxu0
    %v1082 = vsel %vm254, %v1073, 0
    %v1085 = vsel %vm254, %v1078, 0
    %1087 = vmatprep.subr.mxu0 0.0
    %1088 = vmatpush1.xpose.msra.mxu0 %v256
    %1089 = vmatprep.subr.mxu0 0.0
    %1090 = vmatpush1.xpose.msra.mxu0 %v259
    %1091 = vmatprep.subr.mxu0 0.0
    %1092 = vmatpush1.xpose.msra.mxu0 0.0
    %1093 = vmatprep.subr.mxu0 0.0
    %1094 = vmatpush1.xpose.msra.mxu0 0.0
    %1095 = vmatprep.subr.mxu0 0.0
    %1096 = vmatpush1.xpose.msra.mxu0 0.0
    %1097 = vmatprep.subr.mxu0 0.0
    %1098 = vmatpush1.xpose.msra.mxu0 0.0
    %1099 = vmatprep.subr.mxu0 0.0
    %1100 = vmatpush1.xpose.msra.mxu0 0.0
    %1101 = vmatprep.subr.mxu0 0.0
    %1102 = vmatpush1.xpose.msra.mxu0 0.0
    %1103 = vmatprep.subr.mxu0 0.0
    %1104 = vmatpush1.xpose.msra.mxu0 0.0
    %1105 = vmatprep.subr.mxu0 0.0
    %1106 = vmatpush1.xpose.msra.mxu0 0.0
    %1107 = vmatprep.subr.mxu0 0.0
    %1108 = vmatpush1.xpose.msra.mxu0 0.0
    %1109 = vmatprep.subr.mxu0 0.0
    %1110 = vmatpush1.xpose.msra.mxu0 0.0
    %1111 = vmatprep.subr.mxu0 0.0
    %1112 = vmatpush1.xpose.msra.mxu0 0.0
    %1113 = vmatprep.subr.mxu0 0.0
    %1114 = vmatpush1.xpose.msra.mxu0 0.0
    %1115 = vmatprep.subr.mxu0 0.0
    %1116 = vmatpush1.xpose.msra.mxu0 0.0
    %1117 = vmatprep.subr.mxu0 0.0
    %1118 = vmatpush1.xpose.msra.mxu0 0.0
    %1119 = vmatprep.subr.mxu0 0.0
    %1120 = vmatpush1.xpose.msra.mxu0 0.0
    %1121 = vmatprep.subr.mxu0 0.0
    %1122 = vmatpush1.xpose.msra.mxu0 0.0
    %1123 = vmatprep.subr.mxu0 0.0
    %1124 = vmatpush1.xpose.msra.mxu0 0.0
    %1125 = vmatprep.subr.mxu0 0.0
    %1126 = vmatpush1.xpose.msra.mxu0 0.0
    %1127 = vmatprep.subr.mxu0 0.0
    %1128 = vmatpush1.xpose.msra.mxu0 0.0
    %1129 = vmatprep.subr.mxu0 0.0
    %1130 = vmatpush1.xpose.msra.mxu0 0.0
    %1131 = vmatprep.subr.mxu0 0.0
    %1132 = vmatpush1.xpose.msra.mxu0 0.0
    %1133 = vmatprep.subr.mxu0 0.0
    %1134 = vmatpush1.xpose.msra.mxu0 0.0
    %1135 = vmatprep.subr.mxu0 0.0
    %1136 = vmatpush1.xpose.msra.mxu0 0.0
    %1137 = vmatprep.subr.mxu0 0.0
    %1138 = vmatpush1.xpose.msra.mxu0 0.0
    %1139 = vmatprep.subr.mxu0 0.0
    %1140 = vmatpush1.xpose.msra.mxu0 0.0
    %1141 = vmatprep.subr.mxu0 0.0
    %1142 = vmatpush1.xpose.msra.mxu0 0.0
    %1143 = vmatprep.subr.mxu0 0.0
    %1144 = vmatpush1.xpose.msra.mxu0 0.0
    %1145 = vmatprep.subr.mxu0 0.0
    %1146 = vmatpush1.xpose.msra.mxu0 0.0
    %1147 = vmatprep.subr.mxu0 0.0
    %1148 = vmatpush1.xpose.msra.mxu0 0.0
    %1149 = vmatprep.subr.mxu0 0.0
    %1150 = vmatpush1.xpose.msra.mxu0 0.0
    %1151 = vmatprep.mubr.f32.mxu0 0.0
    %1152 = vmatmul.mubr.f32.gmra.mrb[0].mxu0 %v1082
    %v1153 = vpop.f32.mrb[0].mxu0
    %v1154 = vadd.f32 0.0, %v1153
    %v1155 = vpop.f32.mrb[0].mxu0
    %1156 = vmatprep.mubr.f32.mxu0 0.0
    %1157 = vmatmul.mubr.f32.gmra.mrb[0].mxu0 %v1085
    %v1158 = vpop.f32.mrb[0].mxu0
    %v1159 = vadd.f32 0.0, %v1158
    %v1160 = vpop.f32.mrb[0].mxu0
    %1161 = vdwg.mxu0
    %v1162 = vtanh.pop %v1154
    %v1163 = vtanh.pop %v1159
    %s1164 = scalar_lea.vmem [#allocation11], 32
    %v1165 = vld [vmem:[%s1164] sm:$0xff]
    %v1166 = vld [vmem:[%s1164 + $0x8] sm:$0xff]
    %v1167 = vld [vmem:[%s1164 + $0x10] sm:$0xff]
    %v1168 = vld [vmem:[%s1164 + $0x18] sm:$0xff]
    %1169 = vmatprep.subr.mxu0 0.0
    %1170 = vmatpush1.msra.mxu0 %v1165
    %1171 = vmatprep.subr.mxu0 0.0
    %1172 = vmatpush1.msra.mxu0 %v1166
    %1173 = vmatprep.subr.mxu0 0.0
    %1174 = vmatpush1.msra.mxu0 %v1167
    %1175 = vmatprep.subr.mxu0 0.0
    %1176 = vmatpush1.msra.mxu0 %v1168
    %1177 = vmatprep.subr.mxu0 0.0
    %1178 = vmatpush1.msra.mxu0 0.0
    %1179 = vmatprep.subr.mxu0 0.0
    %1180 = vmatpush1.msra.mxu0 0.0
    %1181 = vmatprep.subr.mxu0 0.0
    %1182 = vmatpush1.msra.mxu0 0.0
    %1183 = vmatprep.subr.mxu0 0.0
    %1184 = vmatpush1.msra.mxu0 0.0
    %1185 = vmatprep.subr.mxu0 0.0
    %1186 = vmatpush1.msra.mxu0 0.0
    %1187 = vmatprep.subr.mxu0 0.0
    %1188 = vmatpush1.msra.mxu0 0.0
    %1189 = vmatprep.subr.mxu0 0.0
    %1190 = vmatpush1.msra.mxu0 0.0
    %1191 = vmatprep.subr.mxu0 0.0
    %1192 = vmatpush1.msra.mxu0 0.0
    %1193 = vmatprep.subr.mxu0 0.0
    %1194 = vmatpush1.msra.mxu0 0.0
    %1195 = vmatprep.subr.mxu0 0.0
    %1196 = vmatpush1.msra.mxu0 0.0
    %1197 = vmatprep.subr.mxu0 0.0
    %1198 = vmatpush1.msra.mxu0 0.0
    %1199 = vmatprep.subr.mxu0 0.0
    %1200 = vmatpush1.msra.mxu0 0.0
    %1201 = vmatprep.subr.mxu0 0.0
    %1202 = vmatpush1.msra.mxu0 0.0
    %1203 = vmatprep.subr.mxu0 0.0
    %1204 = vmatpush1.msra.mxu0 0.0
    %1205 = vmatprep.subr.mxu0 0.0
    %1206 = vmatpush1.msra.mxu0 0.0
    %1207 = vmatprep.subr.mxu0 0.0
    %1208 = vmatpush1.msra.mxu0 0.0
    %1209 = vmatprep.subr.mxu0 0.0
    %1210 = vmatpush1.msra.mxu0 0.0
    %1211 = vmatprep.subr.mxu0 0.0
    %1212 = vmatpush1.msra.mxu0 0.0
    %1213 = vmatprep.subr.mxu0 0.0
    %1214 = vmatpush1.msra.mxu0 0.0
    %1215 = vmatprep.subr.mxu0 0.0
    %1216 = vmatpush1.msra.mxu0 0.0
    %1217 = vmatprep.subr.mxu0 0.0
    %1218 = vmatpush1.msra.mxu0 0.0
    %1219 = vmatprep.subr.mxu0 0.0
    %1220 = vmatpush1.msra.mxu0 0.0
    %1221 = vmatprep.subr.mxu0 0.0
    %1222 = vmatpush1.msra.mxu0 0.0
    %1223 = vmatprep.subr.mxu0 0.0
    %1224 = vmatpush1.msra.mxu0 0.0
    %1225 = vmatprep.subr.mxu0 0.0
    %1226 = vmatpush1.msra.mxu0 0.0
    %1227 = vmatprep.subr.mxu0 0.0
    %1228 = vmatpush1.msra.mxu0 0.0
    %1229 = vmatprep.subr.mxu0 0.0
    %1230 = vmatpush1.msra.mxu0 0.0
    %1231 = vmatprep.subr.mxu0 0.0
    %1232 = vmatpush1.msra.mxu0 0.0
    %1233 = vmatprep.mubr.f32.mxu0 0.0
    %1234 = vmatmul.mubr.f32.gmra.mrb[0].mxu0 %v256
    %v1235 = vpop.f32.mrb[0].mxu0
    %v1236 = vadd.f32 0.0, %v1235
    %v1237 = vpop.f32.mrb[0].mxu0
    %1238 = vmatprep.mubr.f32.mxu0 0.0
    %1239 = vmatmul.mubr.f32.gmra.mrb[0].mxu0 %v259
    %v1240 = vpop.f32.mrb[0].mxu0
    %v1241 = vadd.f32 0.0, %v1240
    %v1242 = vpop.f32.mrb[0].mxu0
    %1243 = vdwg.mxu0
    %v1245 = vsel %vm338, %v1162, 0
    %v1248 = vsel %vm338, %v1163, 0
    %1250 = vmatprep.subr.mxu0 0.0
    %1251 = vmatpush1.msra.mxu0 %v1236
    %1252 = vmatprep.subr.mxu0 0.0
    %1253 = vmatpush1.msra.mxu0 %v1241
    %1254 = vmatprep.subr.mxu0 0.0
    %1255 = vmatpush1.msra.mxu0 0.0
    %1256 = vmatprep.subr.mxu0 0.0
    %1257 = vmatpush1.msra.mxu0 0.0
    %1258 = vmatprep.subr.mxu0 0.0
    %1259 = vmatpush1.msra.mxu0 0.0
    %1260 = vmatprep.subr.mxu0 0.0
    %1261 = vmatpush1.msra.mxu0 0.0
    %1262 = vmatprep.subr.mxu0 0.0
    %1263 = vmatpush1.msra.mxu0 0.0
    %1264 = vmatprep.subr.mxu0 0.0
    %1265 = vmatpush1.msra.mxu0 0.0
    %1266 = vmatprep.subr.mxu0 0.0
    %1267 = vmatpush1.msra.mxu0 0.0
    %1268 = vmatprep.subr.mxu0 0.0
    %1269 = vmatpush1.msra.mxu0 0.0
    %1270 = vmatprep.subr.mxu0 0.0
    %1271 = vmatpush1.msra.mxu0 0.0
    %1272 = vmatprep.subr.mxu0 0.0
    %1273 = vmatpush1.msra.mxu0 0.0
    %1274 = vmatprep.subr.mxu0 0.0
    %1275 = vmatpush1.msra.mxu0 0.0
    %1276 = vmatprep.subr.mxu0 0.0
    %1277 = vmatpush1.msra.mxu0 0.0
    %1278 = vmatprep.subr.mxu0 0.0
    %1279 = vmatpush1.msra.mxu0 0.0
    %1280 = vmatprep.subr.mxu0 0.0
    %1281 = vmatpush1.msra.mxu0 0.0
    %1282 = vmatprep.subr.mxu0 0.0
    %1283 = vmatpush1.msra.mxu0 0.0
    %1284 = vmatprep.subr.mxu0 0.0
    %1285 = vmatpush1.msra.mxu0 0.0
    %1286 = vmatprep.subr.mxu0 0.0
    %1287 = vmatpush1.msra.mxu0 0.0
    %1288 = vmatprep.subr.mxu0 0.0
    %1289 = vmatpush1.msra.mxu0 0.0
    %1290 = vmatprep.subr.mxu0 0.0
    %1291 = vmatpush1.msra.mxu0 0.0
    %1292 = vmatprep.subr.mxu0 0.0
    %1293 = vmatpush1.msra.mxu0 0.0
    %1294 = vmatprep.subr.mxu0 0.0
    %1295 = vmatpush1.msra.mxu0 0.0
    %1296 = vmatprep.subr.mxu0 0.0
    %1297 = vmatpush1.msra.mxu0 0.0
    %1298 = vmatprep.subr.mxu0 0.0
    %1299 = vmatpush1.msra.mxu0 0.0
    %1300 = vmatprep.subr.mxu0 0.0
    %1301 = vmatpush1.msra.mxu0 0.0
    %1302 = vmatprep.subr.mxu0 0.0
    %1303 = vmatpush1.msra.mxu0 0.0
    %1304 = vmatprep.subr.mxu0 0.0
    %1305 = vmatpush1.msra.mxu0 0.0
    %1306 = vmatprep.subr.mxu0 0.0
    %1307 = vmatpush1.msra.mxu0 0.0
    %1308 = vmatprep.subr.mxu0 0.0
    %1309 = vmatpush1.msra.mxu0 0.0
    %1310 = vmatprep.subr.mxu0 0.0
    %1311 = vmatpush1.msra.mxu0 0.0
    %1312 = vmatprep.subr.mxu0 0.0
    %1313 = vmatpush1.msra.mxu0 0.0
    %1314 = vmatprep.mubr.f32.mxu0 0.0
    %1315 = vmatmul.mubr.f32.gmra.mrb[0].mxu0 %v1245
    %v1316 = vpop.f32.mrb[0].mxu0
    %v1317 = vadd.f32 0.0, %v1316
    %v1318 = vpop.f32.mrb[0].mxu0
    %1319 = vmatprep.mubr.f32.mxu0 0.0
    %1320 = vmatmul.mubr.f32.gmra.mrb[0].mxu0 %v1248
    %v1321 = vpop.f32.mrb[0].mxu0
    %v1322 = vadd.f32 0.0, %v1321
    %v1323 = vpop.f32.mrb[0].mxu0
    %1324 = vdwg.mxu0
    %v1326 = vsel %vm338, %v920, 0
    %v1329 = vsel %vm338, %v921, 0
    %1331 = vmatprep.subr.mxu0 0.0
    %1332 = vmatpush1.msra.mxu0 %v993
    %1333 = vmatprep.subr.mxu0 0.0
    %1334 = vmatpush1.msra.mxu0 %v998
    %1335 = vmatprep.subr.mxu0 0.0
    %1336 = vmatpush1.msra.mxu0 0.0
    %1337 = vmatprep.subr.mxu0 0.0
    %1338 = vmatpush1.msra.mxu0 0.0
    %1339 = vmatprep.subr.mxu0 0.0
    %1340 = vmatpush1.msra.mxu0 0.0
    %1341 = vmatprep.subr.mxu0 0.0
    %1342 = vmatpush1.msra.mxu0 0.0
    %1343 = vmatprep.subr.mxu0 0.0
    %1344 = vmatpush1.msra.mxu0 0.0
    %1345 = vmatprep.subr.mxu0 0.0
    %1346 = vmatpush1.msra.mxu0 0.0
    %1347 = vmatprep.subr.mxu0 0.0
    %1348 = vmatpush1.msra.mxu0 0.0
    %1349 = vmatprep.subr.mxu0 0.0
    %1350 = vmatpush1.msra.mxu0 0.0
    %1351 = vmatprep.subr.mxu0 0.0
    %1352 = vmatpush1.msra.mxu0 0.0
    %1353 = vmatprep.subr.mxu0 0.0
    %1354 = vmatpush1.msra.mxu0 0.0
    %1355 = vmatprep.subr.mxu0 0.0
    %1356 = vmatpush1.msra.mxu0 0.0
    %1357 = vmatprep.subr.mxu0 0.0
    %1358 = vmatpush1.msra.mxu0 0.0
    %1359 = vmatprep.subr.mxu0 0.0
    %1360 = vmatpush1.msra.mxu0 0.0
    %1361 = vmatprep.subr.mxu0 0.0
    %1362 = vmatpush1.msra.mxu0 0.0
    %1363 = vmatprep.subr.mxu0 0.0
    %1364 = vmatpush1.msra.mxu0 0.0
    %1365 = vmatprep.subr.mxu0 0.0
    %1366 = vmatpush1.msra.mxu0 0.0
    %1367 = vmatprep.subr.mxu0 0.0
    %1368 = vmatpush1.msra.mxu0 0.0
    %1369 = vmatprep.subr.mxu0 0.0
    %1370 = vmatpush1.msra.mxu0 0.0
    %1371 = vmatprep.subr.mxu0 0.0
    %1372 = vmatpush1.msra.mxu0 0.0
    %1373 = vmatprep.subr.mxu0 0.0
    %1374 = vmatpush1.msra.mxu0 0.0
    %1375 = vmatprep.subr.mxu0 0.0
    %1376 = vmatpush1.msra.mxu0 0.0
    %1377 = vmatprep.subr.mxu0 0.0
    %1378 = vmatpush1.msra.mxu0 0.0
    %1379 = vmatprep.subr.mxu0 0.0
    %1380 = vmatpush1.msra.mxu0 0.0
    %1381 = vmatprep.subr.mxu0 0.0
    %1382 = vmatpush1.msra.mxu0 0.0
    %1383 = vmatprep.subr.mxu0 0.0
    %1384 = vmatpush1.msra.mxu0 0.0
    %1385 = vmatprep.subr.mxu0 0.0
    %1386 = vmatpush1.msra.mxu0 0.0
    %1387 = vmatprep.subr.mxu0 0.0
    %1388 = vmatpush1.msra.mxu0 0.0
    %1389 = vmatprep.subr.mxu0 0.0
    %1390 = vmatpush1.msra.mxu0 0.0
    %1391 = vmatprep.subr.mxu0 0.0
    %1392 = vmatpush1.msra.mxu0 0.0
    %1393 = vmatprep.subr.mxu0 0.0
    %1394 = vmatpush1.msra.mxu0 0.0
    %1395 = vmatprep.mubr.f32.mxu0 0.0
    %1396 = vmatmul.mubr.f32.gmra.mrb[0].mxu0 %v1326
    %v1397 = vpop.f32.mrb[0].mxu0
    %v1398 = vadd.f32 %v1317, %v1397
    %v1399 = vpop.f32.mrb[0].mxu0
    %1400 = vmatprep.mubr.f32.mxu0 0.0
    %1401 = vmatmul.mubr.f32.gmra.mrb[0].mxu0 %v1329
    %v1402 = vpop.f32.mrb[0].mxu0
    %v1403 = vadd.f32 %v1322, %v1402
    %v1404 = vpop.f32.mrb[0].mxu0
    %1405 = vdwg.mxu0
    %v1406 = vld [vmem:[%s10] sm:$0x1]
    %v1408 = vlaneseq
    %v1409 = vshrl.u32 %v1408, 7
    %v1410 = vsub.s32 0, %v1409
    %v1411 = vrot.slane %v1406, %v1410
    %v1413 = vadd.f32 %v1398, %v1411
    %v1414 = vadd.f32 %v1403, %v1411
    %v1415 = vmax.f32 %v1413, 0.0
    %v1416 = vmax.f32 %v1414, 0.0
    %v1417 = vadd.f32 %v244, %v1415
    %v1418 = vadd.f32 %v249, %v1416
    %s1419 = scalar_lea.vmem %s8, 64
    %v1420 = vld [vmem:[%s1419] sm:$0xff]
    %v1421 = vld [vmem:[%s1419 + $0x8] sm:$0xff]
    %v1422 = vld [vmem:[%s1419 + $0x10] sm:$0xff]
    %v1423 = vld [vmem:[%s1419 + $0x18] sm:$0xff]
    %v1425 = vsel %vm254, %v1417, 0
    %v1428 = vsel %vm254, %v1418, 0
    %1430 = vmatprep.subr.mxu0 0.0
    %1431 = vmatpush1.msra.mxu0 %v1420
    %1432 = vmatprep.subr.mxu0 0.0
    %1433 = vmatpush1.msra.mxu0 %v1421
    %1434 = vmatprep.subr.mxu0 0.0
    %1435 = vmatpush1.msra.mxu0 %v1422
    %1436 = vmatprep.subr.mxu0 0.0
    %1437 = vmatpush1.msra.mxu0 %v1423
    %1438 = vmatprep.subr.mxu0 0.0
    %1439 = vmatpush1.msra.mxu0 0.0
    %1440 = vmatprep.subr.mxu0 0.0
    %1441 = vmatpush1.msra.mxu0 0.0
    %1442 = vmatprep.subr.mxu0 0.0
    %1443 = vmatpush1.msra.mxu0 0.0
    %1444 = vmatprep.subr.mxu0 0.0
    %1445 = vmatpush1.msra.mxu0 0.0
    %1446 = vmatprep.subr.mxu0 0.0
    %1447 = vmatpush1.msra.mxu0 0.0
    %1448 = vmatprep.subr.mxu0 0.0
    %1449 = vmatpush1.msra.mxu0 0.0
    %1450 = vmatprep.subr.mxu0 0.0
    %1451 = vmatpush1.msra.mxu0 0.0
    %1452 = vmatprep.subr.mxu0 0.0
    %1453 = vmatpush1.msra.mxu0 0.0
    %1454 = vmatprep.subr.mxu0 0.0
    %1455 = vmatpush1.msra.mxu0 0.0
    %1456 = vmatprep.subr.mxu0 0.0
    %1457 = vmatpush1.msra.mxu0 0.0
    %1458 = vmatprep.subr.mxu0 0.0
    %1459 = vmatpush1.msra.mxu0 0.0
    %1460 = vmatprep.subr.mxu0 0.0
    %1461 = vmatpush1.msra.mxu0 0.0
    %1462 = vmatprep.subr.mxu0 0.0
    %1463 = vmatpush1.msra.mxu0 0.0
    %1464 = vmatprep.subr.mxu0 0.0
    %1465 = vmatpush1.msra.mxu0 0.0
    %1466 = vmatprep.subr.mxu0 0.0
    %1467 = vmatpush1.msra.mxu0 0.0
    %1468 = vmatprep.subr.mxu0 0.0
    %1469 = vmatpush1.msra.mxu0 0.0
    %1470 = vmatprep.subr.mxu0 0.0
    %1471 = vmatpush1.msra.mxu0 0.0
    %1472 = vmatprep.subr.mxu0 0.0
    %1473 = vmatpush1.msra.mxu0 0.0
    %1474 = vmatprep.subr.mxu0 0.0
    %1475 = vmatpush1.msra.mxu0 0.0
    %1476 = vmatprep.subr.mxu0 0.0
    %1477 = vmatpush1.msra.mxu0 0.0
    %1478 = vmatprep.subr.mxu0 0.0
    %1479 = vmatpush1.msra.mxu0 0.0
    %1480 = vmatprep.subr.mxu0 0.0
    %1481 = vmatpush1.msra.mxu0 0.0
    %1482 = vmatprep.subr.mxu0 0.0
    %1483 = vmatpush1.msra.mxu0 0.0
    %1484 = vmatprep.subr.mxu0 0.0
    %1485 = vmatpush1.msra.mxu0 0.0
    %1486 = vmatprep.subr.mxu0 0.0
    %1487 = vmatpush1.msra.mxu0 0.0
    %1488 = vmatprep.subr.mxu0 0.0
    %1489 = vmatpush1.msra.mxu0 0.0
    %1490 = vmatprep.subr.mxu0 0.0
    %1491 = vmatpush1.msra.mxu0 0.0
    %1492 = vmatprep.subr.mxu0 0.0
    %1493 = vmatpush1.msra.mxu0 0.0
    %1494 = vmatprep.mubr.f32.mxu0 0.0
    %1495 = vmatmul.mubr.f32.gmra.mrb[0].mxu0 %v1425
    %v1496 = vpop.f32.mrb[0].mxu0
    %v1497 = vadd.f32 0.0, %v1496
    %v1498 = vpop.f32.mrb[0].mxu0
    %1499 = vmatprep.mubr.f32.mxu0 0.0
    %1500 = vmatmul.mubr.f32.gmra.mrb[0].mxu0 %v1428
    %v1501 = vpop.f32.mrb[0].mxu0
    %v1502 = vadd.f32 0.0, %v1501
    %v1503 = vpop.f32.mrb[0].mxu0
    %1504 = vdwg.mxu0
    %v1506 = vsel %vm254, %v1497, 0
    %v1509 = vsel %vm254, %v1502, 0
    %1511 = vmatprep.subr.mxu0 0.0
    %1512 = vmatpush1.xpose.msra.mxu0 %v1425
    %1513 = vmatprep.subr.mxu0 0.0
    %1514 = vmatpush1.xpose.msra.mxu0 %v1428
    %1515 = vmatprep.subr.mxu0 0.0
    %1516 = vmatpush1.xpose.msra.mxu0 0.0
    %1517 = vmatprep.subr.mxu0 0.0
    %1518 = vmatpush1.xpose.msra.mxu0 0.0
    %1519 = vmatprep.subr.mxu0 0.0
    %1520 = vmatpush1.xpose.msra.mxu0 0.0
    %1521 = vmatprep.subr.mxu0 0.0
    %1522 = vmatpush1.xpose.msra.mxu0 0.0
    %1523 = vmatprep.subr.mxu0 0.0
    %1524 = vmatpush1.xpose.msra.mxu0 0.0
    %1525 = vmatprep.subr.mxu0 0.0
    %1526 = vmatpush1.xpose.msra.mxu0 0.0
    %1527 = vmatprep.subr.mxu0 0.0
    %1528 = vmatpush1.xpose.msra.mxu0 0.0
    %1529 = vmatprep.subr.mxu0 0.0
    %1530 = vmatpush1.xpose.msra.mxu0 0.0
    %1531 = vmatprep.subr.mxu0 0.0
    %1532 = vmatpush1.xpose.msra.mxu0 0.0
    %1533 = vmatprep.subr.mxu0 0.0
    %1534 = vmatpush1.xpose.msra.mxu0 0.0
    %1535 = vmatprep.subr.mxu0 0.0
    %1536 = vmatpush1.xpose.msra.mxu0 0.0
    %1537 = vmatprep.subr.mxu0 0.0
    %1538 = vmatpush1.xpose.msra.mxu0 0.0
    %1539 = vmatprep.subr.mxu0 0.0
    %1540 = vmatpush1.xpose.msra.mxu0 0.0
    %1541 = vmatprep.subr.mxu0 0.0
    %1542 = vmatpush1.xpose.msra.mxu0 0.0
    %1543 = vmatprep.subr.mxu0 0.0
    %1544 = vmatpush1.xpose.msra.mxu0 0.0
    %1545 = vmatprep.subr.mxu0 0.0
    %1546 = vmatpush1.xpose.msra.mxu0 0.0
    %1547 = vmatprep.subr.mxu0 0.0
    %1548 = vmatpush1.xpose.msra.mxu0 0.0
    %1549 = vmatprep.subr.mxu0 0.0
    %1550 = vmatpush1.xpose.msra.mxu0 0.0
    %1551 = vmatprep.subr.mxu0 0.0
    %1552 = vmatpush1.xpose.msra.mxu0 0.0
    %1553 = vmatprep.subr.mxu0 0.0
    %1554 = vmatpush1.xpose.msra.mxu0 0.0
    %1555 = vmatprep.subr.mxu0 0.0
    %1556 = vmatpush1.xpose.msra.mxu0 0.0
    %1557 = vmatprep.subr.mxu0 0.0
    %1558 = vmatpush1.xpose.msra.mxu0 0.0
    %1559 = vmatprep.subr.mxu0 0.0
    %1560 = vmatpush1.xpose.msra.mxu0 0.0
    %1561 = vmatprep.subr.mxu0 0.0
    %1562 = vmatpush1.xpose.msra.mxu0 0.0
    %1563 = vmatprep.subr.mxu0 0.0
    %1564 = vmatpush1.xpose.msra.mxu0 0.0
    %1565 = vmatprep.subr.mxu0 0.0
    %1566 = vmatpush1.xpose.msra.mxu0 0.0
    %1567 = vmatprep.subr.mxu0 0.0
    %1568 = vmatpush1.xpose.msra.mxu0 0.0
    %1569 = vmatprep.subr.mxu0 0.0
    %1570 = vmatpush1.xpose.msra.mxu0 0.0
    %1571 = vmatprep.subr.mxu0 0.0
    %1572 = vmatpush1.xpose.msra.mxu0 0.0
    %1573 = vmatprep.subr.mxu0 0.0
    %1574 = vmatpush1.xpose.msra.mxu0 0.0
    %1575 = vmatprep.mubr.f32.mxu0 0.0
    %1576 = vmatmul.mubr.f32.gmra.mrb[0].mxu0 %v1506
    %v1577 = vpop.f32.mrb[0].mxu0
    %v1578 = vadd.f32 0.0, %v1577
    %v1579 = vpop.f32.mrb[0].mxu0
    %1580 = vmatprep.mubr.f32.mxu0 0.0
    %1581 = vmatmul.mubr.f32.gmra.mrb[0].mxu0 %v1509
    %v1582 = vpop.f32.mrb[0].mxu0
    %v1583 = vadd.f32 0.0, %v1582
    %v1584 = vpop.f32.mrb[0].mxu0
    %1585 = vdwg.mxu0
    %v1586 = vtanh.pop %v1578
    %v1587 = vtanh.pop %v1583
    %s1588 = scalar_lea.vmem [#allocation11], 64
    %v1589 = vld [vmem:[%s1588] sm:$0xff]
    %v1590 = vld [vmem:[%s1588 + $0x8] sm:$0xff]
    %v1591 = vld [vmem:[%s1588 + $0x10] sm:$0xff]
    %v1592 = vld [vmem:[%s1588 + $0x18] sm:$0xff]
    %1593 = vmatprep.subr.mxu0 0.0
    %1594 = vmatpush1.msra.mxu0 %v1589
    %1595 = vmatprep.subr.mxu0 0.0
    %1596 = vmatpush1.msra.mxu0 %v1590
    %1597 = vmatprep.subr.mxu0 0.0
    %1598 = vmatpush1.msra.mxu0 %v1591
    %1599 = vmatprep.subr.mxu0 0.0
    %1600 = vmatpush1.msra.mxu0 %v1592
    %1601 = vmatprep.subr.mxu0 0.0
    %1602 = vmatpush1.msra.mxu0 0.0
    %1603 = vmatprep.subr.mxu0 0.0
    %1604 = vmatpush1.msra.mxu0 0.0
    %1605 = vmatprep.subr.mxu0 0.0
    %1606 = vmatpush1.msra.mxu0 0.0
    %1607 = vmatprep.subr.mxu0 0.0
    %1608 = vmatpush1.msra.mxu0 0.0
    %1609 = vmatprep.subr.mxu0 0.0
    %1610 = vmatpush1.msra.mxu0 0.0
    %1611 = vmatprep.subr.mxu0 0.0
    %1612 = vmatpush1.msra.mxu0 0.0
    %1613 = vmatprep.subr.mxu0 0.0
    %1614 = vmatpush1.msra.mxu0 0.0
    %1615 = vmatprep.subr.mxu0 0.0
    %1616 = vmatpush1.msra.mxu0 0.0
    %1617 = vmatprep.subr.mxu0 0.0
    %1618 = vmatpush1.msra.mxu0 0.0
    %1619 = vmatprep.subr.mxu0 0.0
    %1620 = vmatpush1.msra.mxu0 0.0
    %1621 = vmatprep.subr.mxu0 0.0
    %1622 = vmatpush1.msra.mxu0 0.0
    %1623 = vmatprep.subr.mxu0 0.0
    %1624 = vmatpush1.msra.mxu0 0.0
    %1625 = vmatprep.subr.mxu0 0.0
    %1626 = vmatpush1.msra.mxu0 0.0
    %1627 = vmatprep.subr.mxu0 0.0
    %1628 = vmatpush1.msra.mxu0 0.0
    %1629 = vmatprep.subr.mxu0 0.0
    %1630 = vmatpush1.msra.mxu0 0.0
    %1631 = vmatprep.subr.mxu0 0.0
    %1632 = vmatpush1.msra.mxu0 0.0
    %1633 = vmatprep.subr.mxu0 0.0
    %1634 = vmatpush1.msra.mxu0 0.0
    %1635 = vmatprep.subr.mxu0 0.0
    %1636 = vmatpush1.msra.mxu0 0.0
    %1637 = vmatprep.subr.mxu0 0.0
    %1638 = vmatpush1.msra.mxu0 0.0
    %1639 = vmatprep.subr.mxu0 0.0
    %1640 = vmatpush1.msra.mxu0 0.0
    %1641 = vmatprep.subr.mxu0 0.0
    %1642 = vmatpush1.msra.mxu0 0.0
    %1643 = vmatprep.subr.mxu0 0.0
    %1644 = vmatpush1.msra.mxu0 0.0
    %1645 = vmatprep.subr.mxu0 0.0
    %1646 = vmatpush1.msra.mxu0 0.0
    %1647 = vmatprep.subr.mxu0 0.0
    %1648 = vmatpush1.msra.mxu0 0.0
    %1649 = vmatprep.subr.mxu0 0.0
    %1650 = vmatpush1.msra.mxu0 0.0
    %1651 = vmatprep.subr.mxu0 0.0
    %1652 = vmatpush1.msra.mxu0 0.0
    %1653 = vmatprep.subr.mxu0 0.0
    %1654 = vmatpush1.msra.mxu0 0.0
    %1655 = vmatprep.subr.mxu0 0.0
    %1656 = vmatpush1.msra.mxu0 0.0
    %1657 = vmatprep.mubr.f32.mxu0 0.0
    %1658 = vmatmul.mubr.f32.gmra.mrb[0].mxu0 %v1425
    %v1659 = vpop.f32.mrb[0].mxu0
    %v1660 = vadd.f32 0.0, %v1659
    %v1661 = vpop.f32.mrb[0].mxu0
    %1662 = vmatprep.mubr.f32.mxu0 0.0
    %1663 = vmatmul.mubr.f32.gmra.mrb[0].mxu0 %v1428
    %v1664 = vpop.f32.mrb[0].mxu0
    %v1665 = vadd.f32 0.0, %v1664
    %v1666 = vpop.f32.mrb[0].mxu0
    %1667 = vdwg.mxu0
    %s1668 = scalar_lea.vmem %s8, 96
    %v1669 = vld [vmem:[%s1668] sm:$0xff]
    %v1670 = vld [vmem:[%s1668 + $0x8] sm:$0xff]
    %v1671 = vld [vmem:[%s1668 + $0x10] sm:$0xff]
    %v1672 = vld [vmem:[%s1668 + $0x18] sm:$0xff]
    %1673 = vmatprep.subr.mxu0 0.0
    %1674 = vmatpush1.msra.mxu0 %v1669
    %1675 = vmatprep.subr.mxu0 0.0
    %1676 = vmatpush1.msra.mxu0 %v1670
    %1677 = vmatprep.subr.mxu0 0.0
    %1678 = vmatpush1.msra.mxu0 %v1671
    %1679 = vmatprep.subr.mxu0 0.0
    %1680 = vmatpush1.msra.mxu0 %v1672
    %1681 = vmatprep.subr.mxu0 0.0
    %1682 = vmatpush1.msra.mxu0 0.0
    %1683 = vmatprep.subr.mxu0 0.0
    %1684 = vmatpush1.msra.mxu0 0.0
    %1685 = vmatprep.subr.mxu0 0.0
    %1686 = vmatpush1.msra.mxu0 0.0
    %1687 = vmatprep.subr.mxu0 0.0
    %1688 = vmatpush1.msra.mxu0 0.0
    %1689 = vmatprep.subr.mxu0 0.0
    %1690 = vmatpush1.msra.mxu0 0.0
    %1691 = vmatprep.subr.mxu0 0.0
    %1692 = vmatpush1.msra.mxu0 0.0
    %1693 = vmatprep.subr.mxu0 0.0
    %1694 = vmatpush1.msra.mxu0 0.0
    %1695 = vmatprep.subr.mxu0 0.0
    %1696 = vmatpush1.msra.mxu0 0.0
    %1697 = vmatprep.subr.mxu0 0.0
    %1698 = vmatpush1.msra.mxu0 0.0
    %1699 = vmatprep.subr.mxu0 0.0
    %1700 = vmatpush1.msra.mxu0 0.0
    %1701 = vmatprep.subr.mxu0 0.0
    %1702 = vmatpush1.msra.mxu0 0.0
    %1703 = vmatprep.subr.mxu0 0.0
    %1704 = vmatpush1.msra.mxu0 0.0
    %1705 = vmatprep.subr.mxu0 0.0
    %1706 = vmatpush1.msra.mxu0 0.0
    %1707 = vmatprep.subr.mxu0 0.0
    %1708 = vmatpush1.msra.mxu0 0.0
    %1709 = vmatprep.subr.mxu0 0.0
    %1710 = vmatpush1.msra.mxu0 0.0
    %1711 = vmatprep.subr.mxu0 0.0
    %1712 = vmatpush1.msra.mxu0 0.0
    %1713 = vmatprep.subr.mxu0 0.0
    %1714 = vmatpush1.msra.mxu0 0.0
    %1715 = vmatprep.subr.mxu0 0.0
    %1716 = vmatpush1.msra.mxu0 0.0
    %1717 = vmatprep.subr.mxu0 0.0
    %1718 = vmatpush1.msra.mxu0 0.0
    %1719 = vmatprep.subr.mxu0 0.0
    %1720 = vmatpush1.msra.mxu0 0.0
    %1721 = vmatprep.subr.mxu0 0.0
    %1722 = vmatpush1.msra.mxu0 0.0
    %1723 = vmatprep.subr.mxu0 0.0
    %1724 = vmatpush1.msra.mxu0 0.0
    %1725 = vmatprep.subr.mxu0 0.0
    %1726 = vmatpush1.msra.mxu0 0.0
    %1727 = vmatprep.subr.mxu0 0.0
    %1728 = vmatpush1.msra.mxu0 0.0
    %1729 = vmatprep.subr.mxu0 0.0
    %1730 = vmatpush1.msra.mxu0 0.0
    %1731 = vmatprep.subr.mxu0 0.0
    %1732 = vmatpush1.msra.mxu0 0.0
    %1733 = vmatprep.subr.mxu0 0.0
    %1734 = vmatpush1.msra.mxu0 0.0
    %1735 = vmatprep.subr.mxu0 0.0
    %1736 = vmatpush1.msra.mxu0 0.0
    %1737 = vmatprep.mubr.f32.mxu0 0.0
    %1738 = vmatmul.mubr.f32.gmra.mrb[0].mxu0 %v1425
    %v1739 = vpop.f32.mrb[0].mxu0
    %v1740 = vadd.f32 0.0, %v1739
    %v1741 = vpop.f32.mrb[0].mxu0
    %1742 = vmatprep.mubr.f32.mxu0 0.0
    %1743 = vmatmul.mubr.f32.gmra.mrb[0].mxu0 %v1428
    %v1744 = vpop.f32.mrb[0].mxu0
    %v1745 = vadd.f32 0.0, %v1744
    %v1746 = vpop.f32.mrb[0].mxu0
    %1747 = vdwg.mxu0
    %v1749 = vsel %vm254, %v1740, 0
    %v1752 = vsel %vm254, %v1745, 0
    %1754 = vmatprep.subr.mxu0 0.0
    %1755 = vmatpush1.xpose.msra.mxu0 %v1425
    %1756 = vmatprep.subr.mxu0 0.0
    %1757 = vmatpush1.xpose.msra.mxu0 %v1428
    %1758 = vmatprep.subr.mxu0 0.0
    %1759 = vmatpush1.xpose.msra.mxu0 0.0
    %1760 = vmatprep.subr.mxu0 0.0
    %1761 = vmatpush1.xpose.msra.mxu0 0.0
    %1762 = vmatprep.subr.mxu0 0.0
    %1763 = vmatpush1.xpose.msra.mxu0 0.0
    %1764 = vmatprep.subr.mxu0 0.0
    %1765 = vmatpush1.xpose.msra.mxu0 0.0
    %1766 = vmatprep.subr.mxu0 0.0
    %1767 = vmatpush1.xpose.msra.mxu0 0.0
    %1768 = vmatprep.subr.mxu0 0.0
    %1769 = vmatpush1.xpose.msra.mxu0 0.0
    %1770 = vmatprep.subr.mxu0 0.0
    %1771 = vmatpush1.xpose.msra.mxu0 0.0
    %1772 = vmatprep.subr.mxu0 0.0
    %1773 = vmatpush1.xpose.msra.mxu0 0.0
    %1774 = vmatprep.subr.mxu0 0.0
    %1775 = vmatpush1.xpose.msra.mxu0 0.0
    %1776 = vmatprep.subr.mxu0 0.0
    %1777 = vmatpush1.xpose.msra.mxu0 0.0
    %1778 = vmatprep.subr.mxu0 0.0
    %1779 = vmatpush1.xpose.msra.mxu0 0.0
    %1780 = vmatprep.subr.mxu0 0.0
    %1781 = vmatpush1.xpose.msra.mxu0 0.0
    %1782 = vmatprep.subr.mxu0 0.0
    %1783 = vmatpush1.xpose.msra.mxu0 0.0
    %1784 = vmatprep.subr.mxu0 0.0
    %1785 = vmatpush1.xpose.msra.mxu0 0.0
    %1786 = vmatprep.subr.mxu0 0.0
    %1787 = vmatpush1.xpose.msra.mxu0 0.0
    %1788 = vmatprep.subr.mxu0 0.0
    %1789 = vmatpush1.xpose.msra.mxu0 0.0
    %1790 = vmatprep.subr.mxu0 0.0
    %1791 = vmatpush1.xpose.msra.mxu0 0.0
    %1792 = vmatprep.subr.mxu0 0.0
    %1793 = vmatpush1.xpose.msra.mxu0 0.0
    %1794 = vmatprep.subr.mxu0 0.0
    %1795 = vmatpush1.xpose.msra.mxu0 0.0
    %1796 = vmatprep.subr.mxu0 0.0
    %1797 = vmatpush1.xpose.msra.mxu0 0.0
    %1798 = vmatprep.subr.mxu0 0.0
    %1799 = vmatpush1.xpose.msra.mxu0 0.0
    %1800 = vmatprep.subr.mxu0 0.0
    %1801 = vmatpush1.xpose.msra.mxu0 0.0
    %1802 = vmatprep.subr.mxu0 0.0
    %1803 = vmatpush1.xpose.msra.mxu0 0.0
    %1804 = vmatprep.subr.mxu0 0.0
    %1805 = vmatpush1.xpose.msra.mxu0 0.0
    %1806 = vmatprep.subr.mxu0 0.0
    %1807 = vmatpush1.xpose.msra.mxu0 0.0
    %1808 = vmatprep.subr.mxu0 0.0
    %1809 = vmatpush1.xpose.msra.mxu0 0.0
    %1810 = vmatprep.subr.mxu0 0.0
    %1811 = vmatpush1.xpose.msra.mxu0 0.0
    %1812 = vmatprep.subr.mxu0 0.0
    %1813 = vmatpush1.xpose.msra.mxu0 0.0
    %1814 = vmatprep.subr.mxu0 0.0
    %1815 = vmatpush1.xpose.msra.mxu0 0.0
    %1816 = vmatprep.subr.mxu0 0.0
    %1817 = vmatpush1.xpose.msra.mxu0 0.0
    %1818 = vmatprep.mubr.f32.mxu0 0.0
    %1819 = vmatmul.mubr.f32.gmra.mrb[0].mxu0 %v1749
    %v1820 = vpop.f32.mrb[0].mxu0
    %v1821 = vadd.f32 0.0, %v1820
    %v1822 = vpop.f32.mrb[0].mxu0
    %1823 = vmatprep.mubr.f32.mxu0 0.0
    %1824 = vmatmul.mubr.f32.gmra.mrb[0].mxu0 %v1752
    %v1825 = vpop.f32.mrb[0].mxu0
    %v1826 = vadd.f32 0.0, %v1825
    %v1827 = vpop.f32.mrb[0].mxu0
    %1828 = vdwg.mxu0
    %v1829 = vtanh.pop %v1821
    %v1830 = vtanh.pop %v1826
    %s1831 = scalar_lea.vmem [#allocation11], 96
    %v1832 = vld [vmem:[%s1831] sm:$0xff]
    %v1833 = vld [vmem:[%s1831 + $0x8] sm:$0xff]
    %v1834 = vld [vmem:[%s1831 + $0x10] sm:$0xff]
    %v1835 = vld [vmem:[%s1831 + $0x18] sm:$0xff]
    %1836 = vmatprep.subr.mxu0 0.0
    %1837 = vmatpush1.msra.mxu0 %v1832
    %1838 = vmatprep.subr.mxu0 0.0
    %1839 = vmatpush1.msra.mxu0 %v1833
    %1840 = vmatprep.subr.mxu0 0.0
    %1841 = vmatpush1.msra.mxu0 %v1834
    %1842 = vmatprep.subr.mxu0 0.0
    %1843 = vmatpush1.msra.mxu0 %v1835
    %1844 = vmatprep.subr.mxu0 0.0
    %1845 = vmatpush1.msra.mxu0 0.0
    %1846 = vmatprep.subr.mxu0 0.0
    %1847 = vmatpush1.msra.mxu0 0.0
    %1848 = vmatprep.subr.mxu0 0.0
    %1849 = vmatpush1.msra.mxu0 0.0
    %1850 = vmatprep.subr.mxu0 0.0
    %1851 = vmatpush1.msra.mxu0 0.0
    %1852 = vmatprep.subr.mxu0 0.0
    %1853 = vmatpush1.msra.mxu0 0.0
    %1854 = vmatprep.subr.mxu0 0.0
    %1855 = vmatpush1.msra.mxu0 0.0
    %1856 = vmatprep.subr.mxu0 0.0
    %1857 = vmatpush1.msra.mxu0 0.0
    %1858 = vmatprep.subr.mxu0 0.0
    %1859 = vmatpush1.msra.mxu0 0.0
    %1860 = vmatprep.subr.mxu0 0.0
    %1861 = vmatpush1.msra.mxu0 0.0
    %1862 = vmatprep.subr.mxu0 0.0
    %1863 = vmatpush1.msra.mxu0 0.0
    %1864 = vmatprep.subr.mxu0 0.0
    %1865 = vmatpush1.msra.mxu0 0.0
    %1866 = vmatprep.subr.mxu0 0.0
    %1867 = vmatpush1.msra.mxu0 0.0
    %1868 = vmatprep.subr.mxu0 0.0
    %1869 = vmatpush1.msra.mxu0 0.0
    %1870 = vmatprep.subr.mxu0 0.0
    %1871 = vmatpush1.msra.mxu0 0.0
    %1872 = vmatprep.subr.mxu0 0.0
    %1873 = vmatpush1.msra.mxu0 0.0
    %1874 = vmatprep.subr.mxu0 0.0
    %1875 = vmatpush1.msra.mxu0 0.0
    %1876 = vmatprep.subr.mxu0 0.0
    %1877 = vmatpush1.msra.mxu0 0.0
    %1878 = vmatprep.subr.mxu0 0.0
    %1879 = vmatpush1.msra.mxu0 0.0
    %1880 = vmatprep.subr.mxu0 0.0
    %1881 = vmatpush1.msra.mxu0 0.0
    %1882 = vmatprep.subr.mxu0 0.0
    %1883 = vmatpush1.msra.mxu0 0.0
    %1884 = vmatprep.subr.mxu0 0.0
    %1885 = vmatpush1.msra.mxu0 0.0
    %1886 = vmatprep.subr.mxu0 0.0
    %1887 = vmatpush1.msra.mxu0 0.0
    %1888 = vmatprep.subr.mxu0 0.0
    %1889 = vmatpush1.msra.mxu0 0.0
    %1890 = vmatprep.subr.mxu0 0.0
    %1891 = vmatpush1.msra.mxu0 0.0
    %1892 = vmatprep.subr.mxu0 0.0
    %1893 = vmatpush1.msra.mxu0 0.0
    %1894 = vmatprep.subr.mxu0 0.0
    %1895 = vmatpush1.msra.mxu0 0.0
    %1896 = vmatprep.subr.mxu0 0.0
    %1897 = vmatpush1.msra.mxu0 0.0
    %1898 = vmatprep.subr.mxu0 0.0
    %1899 = vmatpush1.msra.mxu0 0.0
    %1900 = vmatprep.mubr.f32.mxu0 0.0
    %1901 = vmatmul.mubr.f32.gmra.mrb[0].mxu0 %v1425
    %v1902 = vpop.f32.mrb[0].mxu0
    %v1903 = vadd.f32 0.0, %v1902
    %v1904 = vpop.f32.mrb[0].mxu0
    %1905 = vmatprep.mubr.f32.mxu0 0.0
    %1906 = vmatmul.mubr.f32.gmra.mrb[0].mxu0 %v1428
    %v1907 = vpop.f32.mrb[0].mxu0
    %v1908 = vadd.f32 0.0, %v1907
    %v1909 = vpop.f32.mrb[0].mxu0
    %1910 = vdwg.mxu0
    %v1912 = vsel %vm338, %v1829, 0
    %v1915 = vsel %vm338, %v1830, 0
    %1917 = vmatprep.subr.mxu0 0.0
    %1918 = vmatpush1.msra.mxu0 %v1903
    %1919 = vmatprep.subr.mxu0 0.0
    %1920 = vmatpush1.msra.mxu0 %v1908
    %1921 = vmatprep.subr.mxu0 0.0
    %1922 = vmatpush1.msra.mxu0 0.0
    %1923 = vmatprep.subr.mxu0 0.0
    %1924 = vmatpush1.msra.mxu0 0.0
    %1925 = vmatprep.subr.mxu0 0.0
    %1926 = vmatpush1.msra.mxu0 0.0
    %1927 = vmatprep.subr.mxu0 0.0
    %1928 = vmatpush1.msra.mxu0 0.0
    %1929 = vmatprep.subr.mxu0 0.0
    %1930 = vmatpush1.msra.mxu0 0.0
    %1931 = vmatprep.subr.mxu0 0.0
    %1932 = vmatpush1.msra.mxu0 0.0
    %1933 = vmatprep.subr.mxu0 0.0
    %1934 = vmatpush1.msra.mxu0 0.0
    %1935 = vmatprep.subr.mxu0 0.0
    %1936 = vmatpush1.msra.mxu0 0.0
    %1937 = vmatprep.subr.mxu0 0.0
    %1938 = vmatpush1.msra.mxu0 0.0
    %1939 = vmatprep.subr.mxu0 0.0
    %1940 = vmatpush1.msra.mxu0 0.0
    %1941 = vmatprep.subr.mxu0 0.0
    %1942 = vmatpush1.msra.mxu0 0.0
    %1943 = vmatprep.subr.mxu0 0.0
    %1944 = vmatpush1.msra.mxu0 0.0
    %1945 = vmatprep.subr.mxu0 0.0
    %1946 = vmatpush1.msra.mxu0 0.0
    %1947 = vmatprep.subr.mxu0 0.0
    %1948 = vmatpush1.msra.mxu0 0.0
    %1949 = vmatprep.subr.mxu0 0.0
    %1950 = vmatpush1.msra.mxu0 0.0
    %1951 = vmatprep.subr.mxu0 0.0
    %1952 = vmatpush1.msra.mxu0 0.0
    %1953 = vmatprep.subr.mxu0 0.0
    %1954 = vmatpush1.msra.mxu0 0.0
    %1955 = vmatprep.subr.mxu0 0.0
    %1956 = vmatpush1.msra.mxu0 0.0
    %1957 = vmatprep.subr.mxu0 0.0
    %1958 = vmatpush1.msra.mxu0 0.0
    %1959 = vmatprep.subr.mxu0 0.0
    %1960 = vmatpush1.msra.mxu0 0.0
    %1961 = vmatprep.subr.mxu0 0.0
    %1962 = vmatpush1.msra.mxu0 0.0
    %1963 = vmatprep.subr.mxu0 0.0
    %1964 = vmatpush1.msra.mxu0 0.0
    %1965 = vmatprep.subr.mxu0 0.0
    %1966 = vmatpush1.msra.mxu0 0.0
    %1967 = vmatprep.subr.mxu0 0.0
    %1968 = vmatpush1.msra.mxu0 0.0
    %1969 = vmatprep.subr.mxu0 0.0
    %1970 = vmatpush1.msra.mxu0 0.0
    %1971 = vmatprep.subr.mxu0 0.0
    %1972 = vmatpush1.msra.mxu0 0.0
    %1973 = vmatprep.subr.mxu0 0.0
    %1974 = vmatpush1.msra.mxu0 0.0
    %1975 = vmatprep.subr.mxu0 0.0
    %1976 = vmatpush1.msra.mxu0 0.0
    %1977 = vmatprep.subr.mxu0 0.0
    %1978 = vmatpush1.msra.mxu0 0.0
    %1979 = vmatprep.subr.mxu0 0.0
    %1980 = vmatpush1.msra.mxu0 0.0
    %1981 = vmatprep.mubr.f32.mxu0 0.0
    %1982 = vmatmul.mubr.f32.gmra.mrb[0].mxu0 %v1912
    %v1983 = vpop.f32.mrb[0].mxu0
    %v1984 = vadd.f32 0.0, %v1983
    %v1985 = vpop.f32.mrb[0].mxu0
    %1986 = vmatprep.mubr.f32.mxu0 0.0
    %1987 = vmatmul.mubr.f32.gmra.mrb[0].mxu0 %v1915
    %v1988 = vpop.f32.mrb[0].mxu0
    %v1989 = vadd.f32 0.0, %v1988
    %v1990 = vpop.f32.mrb[0].mxu0
    %1991 = vdwg.mxu0
    %v1993 = vsel %vm338, %v1586, 0
    %v1996 = vsel %vm338, %v1587, 0
    %1998 = vmatprep.subr.mxu0 0.0
    %1999 = vmatpush1.msra.mxu0 %v1660
    %2000 = vmatprep.subr.mxu0 0.0
    %2001 = vmatpush1.msra.mxu0 %v1665
    %2002 = vmatprep.subr.mxu0 0.0
    %2003 = vmatpush1.msra.mxu0 0.0
    %2004 = vmatprep.subr.mxu0 0.0
    %2005 = vmatpush1.msra.mxu0 0.0
    %2006 = vmatprep.subr.mxu0 0.0
    %2007 = vmatpush1.msra.mxu0 0.0
    %2008 = vmatprep.subr.mxu0 0.0
    %2009 = vmatpush1.msra.mxu0 0.0
    %2010 = vmatprep.subr.mxu0 0.0
    %2011 = vmatpush1.msra.mxu0 0.0
    %2012 = vmatprep.subr.mxu0 0.0
    %2013 = vmatpush1.msra.mxu0 0.0
    %2014 = vmatprep.subr.mxu0 0.0
    %2015 = vmatpush1.msra.mxu0 0.0
    %2016 = vmatprep.subr.mxu0 0.0
    %2017 = vmatpush1.msra.mxu0 0.0
    %2018 = vmatprep.subr.mxu0 0.0
    %2019 = vmatpush1.msra.mxu0 0.0
    %2020 = vmatprep.subr.mxu0 0.0
    %2021 = vmatpush1.msra.mxu0 0.0
    %2022 = vmatprep.subr.mxu0 0.0
    %2023 = vmatpush1.msra.mxu0 0.0
    %2024 = vmatprep.subr.mxu0 0.0
    %2025 = vmatpush1.msra.mxu0 0.0
    %2026 = vmatprep.subr.mxu0 0.0
    %2027 = vmatpush1.msra.mxu0 0.0
    %2028 = vmatprep.subr.mxu0 0.0
    %2029 = vmatpush1.msra.mxu0 0.0
    %2030 = vmatprep.subr.mxu0 0.0
    %2031 = vmatpush1.msra.mxu0 0.0
    %2032 = vmatprep.subr.mxu0 0.0
    %2033 = vmatpush1.msra.mxu0 0.0
    %2034 = vmatprep.subr.mxu0 0.0
    %2035 = vmatpush1.msra.mxu0 0.0
    %2036 = vmatprep.subr.mxu0 0.0
    %2037 = vmatpush1.msra.mxu0 0.0
    %2038 = vmatprep.subr.mxu0 0.0
    %2039 = vmatpush1.msra.mxu0 0.0
    %2040 = vmatprep.subr.mxu0 0.0
    %2041 = vmatpush1.msra.mxu0 0.0
    %2042 = vmatprep.subr.mxu0 0.0
    %2043 = vmatpush1.msra.mxu0 0.0
    %2044 = vmatprep.subr.mxu0 0.0
    %2045 = vmatpush1.msra.mxu0 0.0
    %2046 = vmatprep.subr.mxu0 0.0
    %2047 = vmatpush1.msra.mxu0 0.0
    %2048 = vmatprep.subr.mxu0 0.0
    %2049 = vmatpush1.msra.mxu0 0.0
    %2050 = vmatprep.subr.mxu0 0.0
    %2051 = vmatpush1.msra.mxu0 0.0
    %2052 = vmatprep.subr.mxu0 0.0
    %2053 = vmatpush1.msra.mxu0 0.0
    %2054 = vmatprep.subr.mxu0 0.0
    %2055 = vmatpush1.msra.mxu0 0.0
    %2056 = vmatprep.subr.mxu0 0.0
    %2057 = vmatpush1.msra.mxu0 0.0
    %2058 = vmatprep.subr.mxu0 0.0
    %2059 = vmatpush1.msra.mxu0 0.0
    %2060 = vmatprep.subr.mxu0 0.0
    %2061 = vmatpush1.msra.mxu0 0.0
    %2062 = vmatprep.mubr.f32.mxu0 0.0
    %2063 = vmatmul.mubr.f32.gmra.mrb[0].mxu0 %v1993
    %v2064 = vpop.f32.mrb[0].mxu0
    %v2065 = vadd.f32 %v1984, %v2064
    %v2066 = vpop.f32.mrb[0].mxu0
    %2067 = vmatprep.mubr.f32.mxu0 0.0
    %2068 = vmatmul.mubr.f32.gmra.mrb[0].mxu0 %v1996
    %v2069 = vpop.f32.mrb[0].mxu0
    %v2070 = vadd.f32 %v1989, %v2069
    %v2071 = vpop.f32.mrb[0].mxu0
    %2072 = vdwg.mxu0
    %s2073 = scalar_lea.vmem %s10, 1
    %v2074 = vld [vmem:[%s2073] sm:$0x1]
    %v2076 = vlaneseq
    %v2077 = vshrl.u32 %v2076, 7
    %v2078 = vsub.s32 0, %v2077
    %v2079 = vrot.slane %v2074, %v2078
    %v2081 = vadd.f32 %v2065, %v2079
    %v2082 = vadd.f32 %v2070, %v2079
    %v2083 = vmax.f32 %v2081, 0.0
    %v2084 = vmax.f32 %v2082, 0.0
    %v2085 = vadd.f32 %v1417, %v2083
    %v2086 = vadd.f32 %v1418, %v2084
    %v2087 = vld [vmem:[%s11] sm:$0xff]
    %v2088 = vld [vmem:[%s11 + $0x8] sm:$0xff]
    %v2089 = vld [vmem:[%s11 + $0x10] sm:$0xff]
    %v2090 = vld [vmem:[%s11 + $0x18] sm:$0xff]
    %v2091 = vld [vmem:[#allocation13] sm:$0xff]
    %v2092 = vld [vmem:[#allocation13 + $0x8] sm:$0xff]
    %v2093 = vld [vmem:[#allocation13 + $0x10] sm:$0xff]
    %v2094 = vld [vmem:[#allocation13 + $0x18] sm:$0xff]
    %v2096 = vsel %vm254, %v2085, 0
    %v2099 = vsel %vm254, %v2086, 0
    %2101 = vmatprep.subr.mxu0 0.0
    %2102 = vmatpush1.msra.mxu0 %v2091
    %2103 = vmatprep.subr.mxu0 0.0
    %2104 = vmatpush1.msra.mxu0 %v2092
    %2105 = vmatprep.subr.mxu0 0.0
    %2106 = vmatpush1.msra.mxu0 %v2093
    %2107 = vmatprep.subr.mxu0 0.0
    %2108 = vmatpush1.msra.mxu0 %v2094
    %2109 = vmatprep.subr.mxu0 0.0
    %2110 = vmatpush1.msra.mxu0 0.0
    %2111 = vmatprep.subr.mxu0 0.0
    %2112 = vmatpush1.msra.mxu0 0.0
    %2113 = vmatprep.subr.mxu0 0.0
    %2114 = vmatpush1.msra.mxu0 0.0
    %2115 = vmatprep.subr.mxu0 0.0
    %2116 = vmatpush1.msra.mxu0 0.0
    %2117 = vmatprep.subr.mxu0 0.0
    %2118 = vmatpush1.msra.mxu0 0.0
    %2119 = vmatprep.subr.mxu0 0.0
    %2120 = vmatpush1.msra.mxu0 0.0
    %2121 = vmatprep.subr.mxu0 0.0
    %2122 = vmatpush1.msra.mxu0 0.0
    %2123 = vmatprep.subr.mxu0 0.0
    %2124 = vmatpush1.msra.mxu0 0.0
    %2125 = vmatprep.subr.mxu0 0.0
    %2126 = vmatpush1.msra.mxu0 0.0
    %2127 = vmatprep.subr.mxu0 0.0
    %2128 = vmatpush1.msra.mxu0 0.0
    %2129 = vmatprep.subr.mxu0 0.0
    %2130 = vmatpush1.msra.mxu0 0.0
    %2131 = vmatprep.subr.mxu0 0.0
    %2132 = vmatpush1.msra.mxu0 0.0
    %2133 = vmatprep.subr.mxu0 0.0
    %2134 = vmatpush1.msra.mxu0 0.0
    %2135 = vmatprep.subr.mxu0 0.0
    %2136 = vmatpush1.msra.mxu0 0.0
    %2137 = vmatprep.subr.mxu0 0.0
    %2138 = vmatpush1.msra.mxu0 0.0
    %2139 = vmatprep.subr.mxu0 0.0
    %2140 = vmatpush1.msra.mxu0 0.0
    %2141 = vmatprep.subr.mxu0 0.0
    %2142 = vmatpush1.msra.mxu0 0.0
    %2143 = vmatprep.subr.mxu0 0.0
    %2144 = vmatpush1.msra.mxu0 0.0
    %2145 = vmatprep.subr.mxu0 0.0
    %2146 = vmatpush1.msra.mxu0 0.0
    %2147 = vmatprep.subr.mxu0 0.0
    %2148 = vmatpush1.msra.mxu0 0.0
    %2149 = vmatprep.subr.mxu0 0.0
    %2150 = vmatpush1.msra.mxu0 0.0
    %2151 = vmatprep.subr.mxu0 0.0
    %2152 = vmatpush1.msra.mxu0 0.0
    %2153 = vmatprep.subr.mxu0 0.0
    %2154 = vmatpush1.msra.mxu0 0.0
    %2155 = vmatprep.subr.mxu0 0.0
    %2156 = vmatpush1.msra.mxu0 0.0
    %2157 = vmatprep.subr.mxu0 0.0
    %2158 = vmatpush1.msra.mxu0 0.0
    %2159 = vmatprep.subr.mxu0 0.0
    %2160 = vmatpush1.msra.mxu0 0.0
    %2161 = vmatprep.subr.mxu0 0.0
    %2162 = vmatpush1.msra.mxu0 0.0
    %2163 = vmatprep.subr.mxu0 0.0
    %2164 = vmatpush1.msra.mxu0 0.0
    %2165 = vmatprep.mubr.f32.mxu0 0.0
    %2166 = vmatmul.mubr.f32.gmra.mrb[0].mxu0 %v2096
    %v2167 = vpop.f32.mrb[0].mxu0
    %v2168 = vadd.f32 0.0, %v2167
    %v2169 = vpop.f32.mrb[0].mxu0
    %2170 = vmatprep.mubr.f32.mxu0 0.0
    %2171 = vmatmul.mubr.f32.gmra.mrb[0].mxu0 %v2099
    %v2172 = vpop.f32.mrb[0].mxu0
    %v2173 = vadd.f32 0.0, %v2172
    %v2174 = vpop.f32.mrb[0].mxu0
    %2175 = vdwg.mxu0
    %v2177 = vsel %vm254, %v752, 0
    %v2180 = vsel %vm254, %v757, 0
    %2182 = vmatprep.subr.mxu0 0.0
    %2183 = vmatpush1.msra.mxu0 %v2087
    %2184 = vmatprep.subr.mxu0 0.0
    %2185 = vmatpush1.msra.mxu0 %v2088
    %2186 = vmatprep.subr.mxu0 0.0
    %2187 = vmatpush1.msra.mxu0 %v2089
    %2188 = vmatprep.subr.mxu0 0.0
    %2189 = vmatpush1.msra.mxu0 %v2090
    %2190 = vmatprep.subr.mxu0 0.0
    %2191 = vmatpush1.msra.mxu0 0.0
    %2192 = vmatprep.subr.mxu0 0.0
    %2193 = vmatpush1.msra.mxu0 0.0
    %2194 = vmatprep.subr.mxu0 0.0
    %2195 = vmatpush1.msra.mxu0 0.0
    %2196 = vmatprep.subr.mxu0 0.0
    %2197 = vmatpush1.msra.mxu0 0.0
    %2198 = vmatprep.subr.mxu0 0.0
    %2199 = vmatpush1.msra.mxu0 0.0
    %2200 = vmatprep.subr.mxu0 0.0
    %2201 = vmatpush1.msra.mxu0 0.0
    %2202 = vmatprep.subr.mxu0 0.0
    %2203 = vmatpush1.msra.mxu0 0.0
    %2204 = vmatprep.subr.mxu0 0.0
    %2205 = vmatpush1.msra.mxu0 0.0
    %2206 = vmatprep.subr.mxu0 0.0
    %2207 = vmatpush1.msra.mxu0 0.0
    %2208 = vmatprep.subr.mxu0 0.0
    %2209 = vmatpush1.msra.mxu0 0.0
    %2210 = vmatprep.subr.mxu0 0.0
    %2211 = vmatpush1.msra.mxu0 0.0
    %2212 = vmatprep.subr.mxu0 0.0
    %2213 = vmatpush1.msra.mxu0 0.0
    %2214 = vmatprep.subr.mxu0 0.0
    %2215 = vmatpush1.msra.mxu0 0.0
    %2216 = vmatprep.subr.mxu0 0.0
    %2217 = vmatpush1.msra.mxu0 0.0
    %2218 = vmatprep.subr.mxu0 0.0
    %2219 = vmatpush1.msra.mxu0 0.0
    %2220 = vmatprep.subr.mxu0 0.0
    %2221 = vmatpush1.msra.mxu0 0.0
    %2222 = vmatprep.subr.mxu0 0.0
    %2223 = vmatpush1.msra.mxu0 0.0
    %2224 = vmatprep.subr.mxu0 0.0
    %2225 = vmatpush1.msra.mxu0 0.0
    %2226 = vmatprep.subr.mxu0 0.0
    %2227 = vmatpush1.msra.mxu0 0.0
    %2228 = vmatprep.subr.mxu0 0.0
    %2229 = vmatpush1.msra.mxu0 0.0
    %2230 = vmatprep.subr.mxu0 0.0
    %2231 = vmatpush1.msra.mxu0 0.0
    %2232 = vmatprep.subr.mxu0 0.0
    %2233 = vmatpush1.msra.mxu0 0.0
    %2234 = vmatprep.subr.mxu0 0.0
    %2235 = vmatpush1.msra.mxu0 0.0
    %2236 = vmatprep.subr.mxu0 0.0
    %2237 = vmatpush1.msra.mxu0 0.0
    %2238 = vmatprep.subr.mxu0 0.0
    %2239 = vmatpush1.msra.mxu0 0.0
    %2240 = vmatprep.subr.mxu0 0.0
    %2241 = vmatpush1.msra.mxu0 0.0
    %2242 = vmatprep.subr.mxu0 0.0
    %2243 = vmatpush1.msra.mxu0 0.0
    %2244 = vmatprep.subr.mxu0 0.0
    %2245 = vmatpush1.msra.mxu0 0.0
    %2246 = vmatprep.mubr.f32.mxu0 0.0
    %2247 = vmatmul.mubr.f32.gmra.mrb[0].mxu0 %v2177
    %v2248 = vpop.f32.mrb[0].mxu0
    %v2249 = vadd.f32 %v2168, %v2248
    %v2250 = vpop.f32.mrb[0].mxu0
    %2251 = vmatprep.mubr.f32.mxu0 0.0
    %2252 = vmatmul.mubr.f32.gmra.mrb[0].mxu0 %v2180
    %v2253 = vpop.f32.mrb[0].mxu0
    %v2254 = vadd.f32 %v2173, %v2253
    %v2255 = vpop.f32.mrb[0].mxu0
    %2256 = vdwg.mxu0
    %v2257 = vld [vmem:[%s13] sm:$0x1]
    %v2259 = vlaneseq
    %v2260 = vshrl.u32 %v2259, 7
    %v2261 = vsub.s32 0, %v2260
    %v2262 = vrot.slane %v2257, %v2261
    %v2264 = vadd.f32 %v2249, %v2262
    %v2265 = vadd.f32 %v2254, %v2262
    %v2266 = vld [vmem:[%s1] sm:$0xff]
    %v2267 = vld [vmem:[%s1 + $0x8] sm:$0xff]
    %2268 = vset.pattern.permute.xlu0 0
    %2269 = vperm.xlu0 %2268, %v2266
    %v2270 = vpop.permute.xlu0 %2269
    %2271 = vset.pattern.permute.xlu0 0
    %2272 = vperm.xlu0 %2271, %v2267
    %v2273 = vpop.permute.xlu0 %2272
    %vm2274 = vcmp.eq.s32.totalorder %v146, %v2270
    %vm2275 = vcmp.eq.s32.totalorder %v146, %v2273
    %v2276 = vsel %vm2274, 1, 0
    %v2277 = vsel %vm2275, 1, 0
    %v2278 = vcvt.s32.f32 %v2276
    %v2279 = vcvt.s32.f32 %v2277
    %v2281 = vsel %vm338, %v2278, 0
    %v2284 = vsel %vm338, %v2279, 0
    %2286 = vmatprep.subr.mxu0 0.0
    %2287 = vmatpush1.msra.mxu0 %v2264
    %2288 = vmatprep.subr.mxu0 0.0
    %2289 = vmatpush1.msra.mxu0 %v2265
    %2290 = vmatprep.subr.mxu0 0.0
    %2291 = vmatpush1.msra.mxu0 0.0
    %2292 = vmatprep.subr.mxu0 0.0
    %2293 = vmatpush1.msra.mxu0 0.0
    %2294 = vmatprep.subr.mxu0 0.0
    %2295 = vmatpush1.msra.mxu0 0.0
    %2296 = vmatprep.subr.mxu0 0.0
    %2297 = vmatpush1.msra.mxu0 0.0
    %2298 = vmatprep.subr.mxu0 0.0
    %2299 = vmatpush1.msra.mxu0 0.0
    %2300 = vmatprep.subr.mxu0 0.0
    %2301 = vmatpush1.msra.mxu0 0.0
    %2302 = vmatprep.subr.mxu0 0.0
    %2303 = vmatpush1.msra.mxu0 0.0
    %2304 = vmatprep.subr.mxu0 0.0
    %2305 = vmatpush1.msra.mxu0 0.0
    %2306 = vmatprep.subr.mxu0 0.0
    %2307 = vmatpush1.msra.mxu0 0.0
    %2308 = vmatprep.subr.mxu0 0.0
    %2309 = vmatpush1.msra.mxu0 0.0
    %2310 = vmatprep.subr.mxu0 0.0
    %2311 = vmatpush1.msra.mxu0 0.0
    %2312 = vmatprep.subr.mxu0 0.0
    %2313 = vmatpush1.msra.mxu0 0.0
    %2314 = vmatprep.subr.mxu0 0.0
    %2315 = vmatpush1.msra.mxu0 0.0
    %2316 = vmatprep.subr.mxu0 0.0
    %2317 = vmatpush1.msra.mxu0 0.0
    %2318 = vmatprep.subr.mxu0 0.0
    %2319 = vmatpush1.msra.mxu0 0.0
    %2320 = vmatprep.subr.mxu0 0.0
    %2321 = vmatpush1.msra.mxu0 0.0
    %2322 = vmatprep.subr.mxu0 0.0
    %2323 = vmatpush1.msra.mxu0 0.0
    %2324 = vmatprep.subr.mxu0 0.0
    %2325 = vmatpush1.msra.mxu0 0.0
    %2326 = vmatprep.subr.mxu0 0.0
    %2327 = vmatpush1.msra.mxu0 0.0
    %2328 = vmatprep.subr.mxu0 0.0
    %2329 = vmatpush1.msra.mxu0 0.0
    %2330 = vmatprep.subr.mxu0 0.0
    %2331 = vmatpush1.msra.mxu0 0.0
    %2332 = vmatprep.subr.mxu0 0.0
    %2333 = vmatpush1.msra.mxu0 0.0
    %2334 = vmatprep.subr.mxu0 0.0
    %2335 = vmatpush1.msra.mxu0 0.0
    %2336 = vmatprep.subr.mxu0 0.0
    %2337 = vmatpush1.msra.mxu0 0.0
    %2338 = vmatprep.subr.mxu0 0.0
    %2339 = vmatpush1.msra.mxu0 0.0
    %2340 = vmatprep.subr.mxu0 0.0
    %2341 = vmatpush1.msra.mxu0 0.0
    %2342 = vmatprep.subr.mxu0 0.0
    %2343 = vmatpush1.msra.mxu0 0.0
    %2344 = vmatprep.subr.mxu0 0.0
    %2345 = vmatpush1.msra.mxu0 0.0
    %2346 = vmatprep.subr.mxu0 0.0
    %2347 = vmatpush1.msra.mxu0 0.0
    %2348 = vmatprep.subr.mxu0 0.0
    %2349 = vmatpush1.msra.mxu0 0.0
    %2350 = vmatprep.mubr.f32.mxu0 0.0
    %2351 = vmatmul.mubr.f32.gmra.mrb[0].mxu0 %v2281
    %v2352 = vpop.f32.mrb[0].mxu0
    %v2353 = vadd.f32 0.0, %v2352
    %v2354 = vpop.f32.mrb[0].mxu0
    %2355 = vmatprep.mubr.f32.mxu0 0.0
    %2356 = vmatmul.mubr.f32.gmra.mrb[0].mxu0 %v2284
    %v2357 = vpop.f32.mrb[0].mxu0
    %v2358 = vadd.f32 0.0, %v2357
    %v2359 = vpop.f32.mrb[0].mxu0
    %2360 = vdwg.mxu0
    %2361 = vst.msk [vmem:[#allocation14] sm:$0xff] %vm254, %v2353
    %2362 = vst.msk [vmem:[#allocation14 + $0x8] sm:$0xff] %vm254, %v2358
    // Predicated region
    $region86: #{tpu_custom_call.1} parent=1 // pred_check
      _
    $region87: #{tpu_custom_call.1} parent=1 // pred_check_branch
      %2364 = sbr.rel (0) target = $region89
    $region88: #{tpu_custom_call.1} parent=1 // pred_region
      %s2366 = ssub.s32 256, 256
      %2367 = vsyncadd [#allocation4], %s2366
      %s2368 = sshll.u32 [#allocation14], 4
      %s2369 = int_to_ptr.vmem [resolvable:$true] %s2368
      %2374 = dma.vmem_to_hbm [thread:$0]  %s2369, 256, %s14, [#allocation4], 128, 128, 8
    $region89: #{tpu_custom_call.1} parent=1 // pred_fallthru
      _
    // Predicated region
    $region90: #{tpu_custom_call.1} parent=1 // pred_check
      _
    $region91: #{tpu_custom_call.1} parent=1 // pred_check_branch
      %2376 = sbr.rel (0) target = $region93
    $region92: #{tpu_custom_call.1} parent=1 // pred_region
      %2377 = dma.done [#allocation4], 256
    $region93: #{tpu_custom_call.1} parent=1 // pred_fallthru
      _
    %2378 = vsyncpa [#allocation3], 1
    %2379 = vsyncpa [#allocation6], 1
    %2380 = vsyncpa [#allocation9], 1
    %2381 = vsyncpa [#allocation12], 1
    %2382 = vsyncpa [#allocation4], 1

</llo_original>
